<compile_context>
chip_gen: v7x
topology: tpu7x:2x2x1
jax: 0.10.0
libtpu: 0.0.40
codegen_flags: <defaults>
</compile_context>

<pallas_src>
import functools

import numpy as np
import jax
import jax.numpy as jnp
from jax.experimental import pallas as pl
from jax.experimental.pallas import tpu as pltpu


# ----------------------------------------------------------------------------
# VMEM budget (re-derived per generation: v5e/v6e 128 MiB -> 64, v7x 64 -> 32)
# ----------------------------------------------------------------------------
def _vmem_limit_bytes():
    cap = None
    try:
        info = pltpu.get_tpu_info()
        cap = getattr(info, "vmem_capacity_bytes", None)
    except Exception:
        cap = None
    if not cap:
        cap = 64 * 1024 * 1024
    return int(min(cap // 2, 64 * 1024 * 1024))


_VMEM_LIMIT = _vmem_limit_bytes()


def _pick_tile(dim, candidates):
    for t in candidates:
        if dim % t == 0:
            return t
    return dim


def _round_up(x, m):
    return ((x + m - 1) // m) * m


def _pc(c):
    # lane-dense padded channel count (multiple of 128)
    return _round_up(c, 128)


# ----------------------------------------------------------------------------
# Pallas kernels
# ----------------------------------------------------------------------------
def _mm_bn_act_kernel(x_ref, w_ref, s_ref, t_ref, o_ref, *, relu):
    # y = (x @ w) * scale + shift ; optional ReLU.  bf16 operands, f32 MXU acc.
    y = jnp.dot(x_ref[...], w_ref[...], preferred_element_type=jnp.float32)
    y = y * s_ref[...] + t_ref[...]
    if relu:
        y = jnp.maximum(y, 0.0)
    o_ref[...] = y.astype(o_ref.dtype)


def _mm_bn_add_act_kernel(x_ref, w_ref, s_ref, t_ref, r_ref, o_ref, *, relu):
    # y = (x @ w) * scale + shift + residual ; optional ReLU
    y = jnp.dot(x_ref[...], w_ref[...], preferred_element_type=jnp.float32)
    y = y * s_ref[...] + t_ref[...] + r_ref[...].astype(jnp.float32)
    if relu:
        y = jnp.maximum(y, 0.0)
    o_ref[...] = y.astype(o_ref.dtype)


def _maxpool_kernel(x_ref, o_ref):
    # x: (TR, 9, C) -> pairwise VPU max over the 9 taps (no mid-axis reduce)
    m = x_ref[:, 0, :]
    for t in range(1, 9):
        m = jnp.maximum(m, x_ref[:, t, :])
    o_ref[...] = m


def _avgpool_kernel(x_ref, o_ref):
    # x: (1, H*W, C) -> mean over spatial axis in f32 (AdaptiveAvgPool2d((1,1)))
    x = x_ref[...].astype(jnp.float32)
    o_ref[...] = jnp.mean(x, axis=1, keepdims=True)


# ----------------------------------------------------------------------------
# Fused matmul wrappers (M- and N-tiled, weight tile resident across M)
# ----------------------------------------------------------------------------
_TM_CANDS = (512, 256, 128, 64, 32, 16, 8)
_TN_CANDS = (512, 256, 128)


@functools.partial(jax.jit, static_argnames=("relu", "out_dtype"))
def fused_matmul(x, w, scale, shift, *, relu, out_dtype=jnp.bfloat16):
    M, K = x.shape
    N = w.shape[1]
    TM = _pick_tile(M, _TM_CANDS)
    TN = _pick_tile(N, _TN_CANDS)
    grid = (N // TN, M // TM)  # M innermost -> weight tile resident across M
    kernel = functools.partial(_mm_bn_act_kernel, relu=relu)
    return pl.pallas_call(
        kernel,
        out_shape=jax.ShapeDtypeStruct((M, N), out_dtype),
        grid=grid,
        in_specs=[
            pl.BlockSpec((TM, K), lambda j, i: (i, 0)),
            pl.BlockSpec((K, TN), lambda j, i: (0, j)),
            pl.BlockSpec((1, TN), lambda j, i: (0, j)),
            pl.BlockSpec((1, TN), lambda j, i: (0, j)),
        ],
        out_specs=pl.BlockSpec((TM, TN), lambda j, i: (i, j)),
        compiler_params=pltpu.CompilerParams(
            dimension_semantics=("parallel", "parallel"),
            vmem_limit_bytes=_VMEM_LIMIT,
        ),
    )(x, w, scale, shift)


@functools.partial(jax.jit, static_argnames=("relu", "out_dtype"))
def fused_matmul_add(x, w, scale, shift, res, *, relu, out_dtype=jnp.bfloat16):
    M, K = x.shape
    N = w.shape[1]
    TM = _pick_tile(M, _TM_CANDS)
    TN = _pick_tile(N, _TN_CANDS)
    grid = (N // TN, M // TM)
    kernel = functools.partial(_mm_bn_add_act_kernel, relu=relu)
    return pl.pallas_call(
        kernel,
        out_shape=jax.ShapeDtypeStruct((M, N), out_dtype),
        grid=grid,
        in_specs=[
            pl.BlockSpec((TM, K), lambda j, i: (i, 0)),
            pl.BlockSpec((K, TN), lambda j, i: (0, j)),
            pl.BlockSpec((1, TN), lambda j, i: (0, j)),
            pl.BlockSpec((1, TN), lambda j, i: (0, j)),
            pl.BlockSpec((TM, TN), lambda j, i: (i, j)),
        ],
        out_specs=pl.BlockSpec((TM, TN), lambda j, i: (i, j)),
        compiler_params=pltpu.CompilerParams(
            dimension_semantics=("parallel", "parallel"),
            vmem_limit_bytes=_VMEM_LIMIT,
        ),
    )(x, w, scale, shift, res)


# ----------------------------------------------------------------------------
# im2col glue (plain JAX, bf16) -- only used for k > 1
# ----------------------------------------------------------------------------
def _im2col(x, k, stride, pad, pad_value=0.0):
    """x: (N,H,W,C) -> patches (N,Ho,Wo,k*k,C)."""
    N, H, W, C = x.shape
    xp = jnp.pad(x, ((0, 0), (pad, pad), (pad, pad), (0, 0)),
                 constant_values=pad_value)
    Ho = (H + 2 * pad - k) // stride + 1
    Wo = (W + 2 * pad - k) // stride + 1
    cols = []
    for i in range(k):
        for j in range(k):
            cols.append(xp[:, i:i + stride * (Ho - 1) + 1:stride,
                           j:j + stride * (Wo - 1) + 1:stride, :])
    patches = jnp.stack(cols, axis=3)  # (N,Ho,Wo,k*k,C)
    return patches, Ho, Wo


def conv_bn_act(x, p, k, stride, pad, relu=True, residual=None):
    """Conv2d(bias=False) + folded BatchNorm2d (+ residual) (+ ReLU), NHWC bf16."""
    N, H, W, C = x.shape
    if k == 1:
        # 1x1 conv: no im2col, no padding copy; just (strided) reshape
        if stride > 1:
            x = x[:, ::stride, ::stride, :]
        Ho, Wo = x.shape[1], x.shape[2]
        xm = x.reshape(N * Ho * Wo, C)
    else:
        patches, Ho, Wo = _im2col(x, k, stride, pad)
        xm = patches.reshape(N * Ho * Wo, k * k * C)
    if residual is None:
        y = fused_matmul(xm, p["w"], p["scale"], p["shift"], relu=relu)
    else:
        res = residual.reshape(N * Ho * Wo, -1)
        y = fused_matmul_add(xm, p["w"], p["scale"], p["shift"], res, relu=relu)
    return y.reshape(N, Ho, Wo, -1)


def maxpool_3x3_s2(x):
    """MaxPool2d(kernel=3, stride=2, padding=1), NHWC bf16."""
    N, H, W, C = x.shape
    patches, Ho, Wo = _im2col(x, 3, 2, 1, pad_value=-jnp.inf)
    R = N * Ho * Wo
    xp = patches.reshape(R, 9, C)
    TR = _pick_tile(R, (1024, 512, 256, 128, 64, 32, 16, 8))
    out = pl.pallas_call(
        _maxpool_kernel,
        out_shape=jax.ShapeDtypeStruct((R, C), x.dtype),
        grid=(R // TR,),
        in_specs=[pl.BlockSpec((TR, 9, C), lambda r: (r, 0, 0))],
        out_specs=pl.BlockSpec((TR, C), lambda r: (r, 0)),
        compiler_params=pltpu.CompilerParams(
            dimension_semantics=("parallel",),
            vmem_limit_bytes=_VMEM_LIMIT,
        ),
    )(xp)
    return out.reshape(N, Ho, Wo, C)


def global_avgpool(x):
    """AdaptiveAvgPool2d((1,1)) + flatten, NHWC -> (N, C) f32."""
    N, H, W, C = x.shape
    xp = x.reshape(N, H * W, C)
    out = pl.pallas_call(
        _avgpool_kernel,
        out_shape=jax.ShapeDtypeStruct((N, 1, C), jnp.float32),
        grid=(N,),
        in_specs=[pl.BlockSpec((1, H * W, C), lambda n: (n, 0, 0))],
        out_specs=pl.BlockSpec((1, 1, C), lambda n: (n, 0, 0)),
        compiler_params=pltpu.CompilerParams(
            dimension_semantics=("parallel",),
            vmem_limit_bytes=_VMEM_LIMIT,
        ),
    )(xp)
    return out.reshape(N, C)


# ----------------------------------------------------------------------------
# Deterministic synthetic parameters (ResNet-50 shapes, BN folded, bf16
# weights, 64-wide channels zero-padded to lane-dense 128)
# ----------------------------------------------------------------------------
def _make_conv_bn(key, cin, cout, k, cin_p=None, cout_p=None):
    cin_p = cin if cin_p is None else cin_p
    cout_p = cout if cout_p is None else cout_p
    ks = jax.random.split(key, 5)
    fan_in = cin * k * k
    w = jax.random.normal(ks[0], (k * k, cin, cout), jnp.float32) * np.sqrt(2.0 / fan_in)
    w_p = jnp.zeros((k * k, cin_p, cout_p), jnp.float32).at[:, :cin, :cout].set(w)
    gamma = 1.0 + 0.1 * jax.random.normal(ks[1], (cout,), jnp.float32)
    beta = 0.1 * jax.random.normal(ks[2], (cout,), jnp.float32)
    mean = 0.1 * jax.random.normal(ks[3], (cout,), jnp.float32)
    var = 1.0 + 0.1 * jax.random.uniform(ks[4], (cout,), jnp.float32)
    scale = gamma / jnp.sqrt(var + 1e-5)
    shift = beta - mean * scale
    scale_p = jnp.ones((cout_p,), jnp.float32).at[:cout].set(scale)
    shift_p = jnp.zeros((cout_p,), jnp.float32).at[:cout].set(shift)
    return {"w": w_p.reshape(k * k * cin_p, cout_p).astype(jnp.bfloat16),
            "scale": scale_p.reshape(1, cout_p),
            "shift": shift_p.reshape(1, cout_p)}


def _make_bottleneck(key, inplanes, planes, downsample):
    ks = jax.random.split(key, 4)
    in_p, pl_p, out_p = _pc(inplanes), _pc(planes), _pc(planes * 4)
    p = {
        "conv1": _make_conv_bn(ks[0], inplanes, planes, 1, cin_p=in_p, cout_p=pl_p),
        "conv2": _make_conv_bn(ks[1], planes, planes, 3, cin_p=pl_p, cout_p=pl_p),
        "conv3": _make_conv_bn(ks[2], planes, planes * 4, 1, cin_p=pl_p, cout_p=out_p),
    }
    if downsample:
        p["down"] = _make_conv_bn(ks[3], inplanes, planes * 4, 1, cin_p=in_p, cout_p=out_p)
    return p


def make_params(key, num_classes=100):
    keys = jax.random.split(key, 7)
    params = {"stem": _make_conv_bn(keys[0], 3, 64, 7, cin_p=3, cout_p=_pc(64))}
    inplanes = 64
    cfg = [("layer1", 64, 3), ("layer2", 128, 4), ("layer3", 256, 6), ("layer4", 512, 3)]
    for (name, planes, blocks), k in zip(cfg, keys[1:5]):
        bkeys = jax.random.split(k, blocks)
        layer = []
        for i in range(blocks):
            layer.append(_make_bottleneck(
                bkeys[i], inplanes if i == 0 else planes * 4, planes, downsample=(i == 0)))
        params[name] = layer
        inplanes = planes * 4
    num_features = inplanes  # 2048 (resnet50 fc.in_features)

    # Head: Linear(2048,1024)+bias -> BatchNorm1d(1024) (folded) -> ReLU
    #       -> Dropout(0.3) (eval: identity) -> Linear(1024, num_classes)+bias
    k1 = jax.random.split(keys[5], 6)
    w1 = jax.random.normal(k1[0], (num_features, 1024), jnp.float32) * np.sqrt(1.0 / num_features)
    b1 = 0.01 * jax.random.normal(k1[1], (1024,), jnp.float32)
    gamma = 1.0 + 0.1 * jax.random.normal(k1[2], (1024,), jnp.float32)
    beta = 0.1 * jax.random.normal(k1[3], (1024,), jnp.float32)
    mean = 0.1 * jax.random.normal(k1[4], (1024,), jnp.float32)
    var = 1.0 + 0.1 * jax.random.uniform(k1[5], (1024,), jnp.float32)
    s1 = gamma / jnp.sqrt(var + 1e-5)
    t1 = beta + (b1 - mean) * s1
    params["fc1_w"] = w1.astype(jnp.bfloat16)
    params["fc1_scale"] = s1.reshape(1, 1024)
    params["fc1_shift"] = t1.reshape(1, 1024)

    nc_p = _pc(num_classes)  # 100 -> 128 lane-dense, sliced after the kernel
    k2 = jax.random.split(keys[6], 2)
    w2 = jax.random.normal(k2[0], (1024, num_classes), jnp.float32) * np.sqrt(1.0 / 1024)
    b2 = 0.01 * jax.random.normal(k2[1], (num_classes,), jnp.float32)
    w2_p = jnp.zeros((1024, nc_p), jnp.float32).at[:, :num_classes].set(w2)
    b2_p = jnp.zeros((nc_p,), jnp.float32).at[:num_classes].set(b2)
    params["fc2_w"] = w2_p.astype(jnp.bfloat16)
    params["fc2_scale"] = jnp.ones((1, nc_p), jnp.float32)
    params["fc2_shift"] = b2_p.reshape(1, nc_p)
    return params


# ----------------------------------------------------------------------------
# Forward pass (ResNet-50 structure + custom head), eval mode
# ----------------------------------------------------------------------------
def bottleneck(x, p, stride):
    identity = x
    out = conv_bn_act(x, p["conv1"], 1, 1, 0, relu=True)
    out = conv_bn_act(out, p["conv2"], 3, stride, 1, relu=True)
    if "down" in p:
        identity = conv_bn_act(x, p["down"], 1, stride, 0, relu=False)
    # conv3 + BN + residual add + ReLU, fused in one Pallas kernel
    out = conv_bn_act(out, p["conv3"], 1, 1, 0, relu=True, residual=identity)
    return out


def _forward_impl(params, x_nchw, num_classes):
    # layout: NCHW in (PyTorch) -> NHWC bf16 internally
    x = jnp.transpose(x_nchw, (0, 2, 3, 1)).astype(jnp.bfloat16)
    x = conv_bn_act(x, params["stem"], 7, 2, 3, relu=True)   # conv1 + bn1 + relu
    x = maxpool_3x3_s2(x)                                     # maxpool
    for name, stride in (("layer1", 1), ("layer2", 2), ("layer3", 2), ("layer4", 2)):
        for i, bp in enumerate(params[name]):
            x = bottleneck(x, bp, stride if i == 0 else 1)
    feat = global_avgpool(x)                                  # (N, 2048) f32
    # Linear(2048,1024) + BatchNorm1d + ReLU (fused); Dropout(0.3) = identity in eval
    h = fused_matmul(feat.astype(jnp.bfloat16), params["fc1_w"],
                     params["fc1_scale"], params["fc1_shift"], relu=True)
    # Linear(1024, num_classes) -- computed lane-dense (128) and sliced
    logits_p = fused_matmul(h, params["fc2_w"], params["fc2_scale"],
                            params["fc2_shift"], relu=False, out_dtype=jnp.float32)
    return logits_p[:, :num_classes]


forward = jax.jit(_forward_impl, static_argnames=("num_classes",))


if __name__ == "__main__":
    key = jax.random.PRNGKey(0)
    pkey, xkey = jax.random.split(key)
    params = make_params(pkey, num_classes=100)
    # Small input consistent with the module: batch=2, RGB, 64x64 spatial (NCHW)
    x = jax.random.normal(xkey, (2, 3, 64, 64), jnp.float32)
    out = forward(params, x, num_classes=100)
    out = jax.block_until_ready(out)
    assert out.shape == (2, 100), out.shape
    assert out.dtype == jnp.float32
    assert bool(jnp.all(jnp.isfinite(out)))
    print("KERNEL_OK")
</pallas_src>

<mosaic_0001>
module attributes {stable_mosaic.version = 11 : i64} {
  func.func @_mm_bn_act_kernel(%arg0: i32, %arg1: i32, %arg2: memref<512x147xbf16, #tpu.memory_space<vmem>>, %arg3: memref<147x128xbf16, #tpu.memory_space<vmem>>, %arg4: memref<1x128xf32, #tpu.memory_space<vmem>>, %arg5: memref<1x128xf32, #tpu.memory_space<vmem>>, %arg6: memref<512x128xbf16, #tpu.memory_space<vmem>>) attributes {dimension_semantics = [#tpu.dimension_semantics<parallel>, #tpu.dimension_semantics<parallel>], iteration_bounds = array<i64: 1, 4>, scalar_prefetch = 0 : i64, scratch_operands = 0 : i64, tpu.core_type = #tpu.core_type<tc>, window_params = [{transform_indices = @transform_0, window_bounds = array<i64: 512, 147>}, {transform_indices = @transform_1, window_bounds = array<i64: 147, 128>}, {transform_indices = @transform_2, window_bounds = array<i64: 1, 128>}, {transform_indices = @transform_3, window_bounds = array<i64: 1, 128>}, {transform_indices = @transform_4, window_bounds = array<i64: 512, 128>}]} {
    %c0 = arith.constant 0 : index
    %c0_0 = arith.constant 0 : index
    %0 = vector.load %arg2[%c0, %c0_0] : memref<512x147xbf16, #tpu.memory_space<vmem>>, vector<512x147xbf16>
    %c0_1 = arith.constant 0 : index
    %c0_2 = arith.constant 0 : index
    %1 = vector.load %arg3[%c0_1, %c0_2] : memref<147x128xbf16, #tpu.memory_space<vmem>>, vector<147x128xbf16>
    %cst = arith.constant dense<0.000000e+00> : vector<512x128xf32>
    %2 = tpu.matmul %0, %1, %cst {dimension_numbers = #tpu.dot_dimension_numbers<[1], [0], [0], [1], [0, 0, 1, 1], [], []>} : vector<512x147xbf16>, vector<147x128xbf16>, vector<512x128xf32> -> vector<512x128xf32>
    %c0_3 = arith.constant 0 : index
    %c0_4 = arith.constant 0 : index
    %3 = vector.load %arg4[%c0_3, %c0_4] : memref<1x128xf32, #tpu.memory_space<vmem>>, vector<1x128xf32>
    %4 = vector.broadcast %3 : vector<1x128xf32> to vector<512x128xf32>
    %5 = arith.mulf %2, %4 : vector<512x128xf32>
    %c0_5 = arith.constant 0 : index
    %c0_6 = arith.constant 0 : index
    %6 = vector.load %arg5[%c0_5, %c0_6] : memref<1x128xf32, #tpu.memory_space<vmem>>, vector<1x128xf32>
    %7 = vector.broadcast %6 : vector<1x128xf32> to vector<512x128xf32>
    %8 = arith.addf %5, %7 : vector<512x128xf32>
    %cst_7 = arith.constant 0.000000e+00 : f32
    %9 = vector.broadcast %cst_7 : f32 to vector<512x128xf32>
    %10 = arith.maximumf %8, %9 : vector<512x128xf32>
    %11 = arith.truncf %10 : vector<512x128xf32> to vector<512x128xbf16>
    %c0_8 = arith.constant 0 : index
    %c0_9 = arith.constant 0 : index
    %12 = vector.load %arg6[%c0_8, %c0_9] : memref<512x128xbf16, #tpu.memory_space<vmem>>, vector<512x128xbf16>
    tpu.vector_store %arg6[%c0_8, %c0_9], %11 {strides = array<i32>} : memref<512x128xbf16, #tpu.memory_space<vmem>>, vector<512x128xbf16>,
    return
  }
  func.func @transform_0(%arg0: i32, %arg1: i32) -> (i32, i32) {
    %c0_i32 = arith.constant 0 : i32
    %c0_i32_0 = arith.constant 0 : i32
    return %arg1, %c0_i32 : i32, i32
  }
  func.func @transform_1(%arg0: i32, %arg1: i32) -> (i32, i32) {
    %c0_i32 = arith.constant 0 : i32
    %c0_i32_0 = arith.constant 0 : i32
    return %c0_i32, %arg0 : i32, i32
  }
  func.func @transform_2(%arg0: i32, %arg1: i32) -> (i32, i32) {
    %c0_i32 = arith.constant 0 : i32
    %c0_i32_0 = arith.constant 0 : i32
    return %c0_i32, %arg0 : i32, i32
  }
  func.func @transform_3(%arg0: i32, %arg1: i32) -> (i32, i32) {
    %c0_i32 = arith.constant 0 : i32
    %c0_i32_0 = arith.constant 0 : i32
    return %c0_i32, %arg0 : i32, i32
  }
  func.func @transform_4(%arg0: i32, %arg1: i32) -> (i32, i32) {
    %c0_i32 = arith.constant 0 : i32
    return %arg1, %arg0 : i32, i32
  }
}

</mosaic_0001>

<llo_original>
// kernel: fused_matmul.1
$region0: #{fused_matmul.1}
  #allocation0 [shape = 'u32[]', space=smem, size = 0x4, offset = 0x4, fixed_abs, tag = 'smem constant byte address 0x4 - core index']
  #allocation1 [shape = 'u32[144,128]{1,0:T(1,128)}', space=vmem, size = 0x12000, scoped, tag = 'internal scratch']
  %s0 = inlined_call_operand.vmem [shape: bf16[2048,147], index: 0, kind: input, shape index: {}]
  %s1 = inlined_call_operand.vmem [shape: bf16[147,128], index: 1, kind: input, shape index: {}]
  %s2 = inlined_call_operand.vmem [shape: f32[1,128], index: 2, kind: input, shape index: {}]
  %s3 = inlined_call_operand.vmem [shape: f32[1,128], index: 3, kind: input, shape index: {}]
  %s4 = inlined_call_operand.hbm [shape: bf16[2048,128], index: 4, kind: output, shape index: {}]
  %s5 = sld [smem:[#allocation0]]
  $region49: #{fused_matmul.1} parent=0
    _
  %s7 = ssub.s32 1, %s5
  %s8 = scalar_select 0, %s7, %s5
  $region1: #{fused_matmul.1} parent=0
    #allocation2 [shape = 'u8[262144]{0}', space=vmem, size = 0x40000, scoped, tag = 'output window, operand 0']
    #allocation3 [shape = 's32[2]{0}', space=sflag, size = 0x8, scoped, tag = 'scoped memory for fused_matmul.1']
    %9 = vsyncpa [#allocation3], 0
    %s10 = scalar_lea.sflag [#allocation3], 1
    %11 = vsyncpa %s10, 0
    loop: start=0, step=1, limit=6
    $region2: #{fused_matmul.1} parent=1 // loop_pre_header
      _
    $region3: #{fused_matmul.1} parent=1 // loop_header
      %s13 = sphi 0, %s17
      %p14 = scmp.ge.s32.totalorder %s13, 6
      %s20 = sphi 0, %s32
      %s21 = sphi 0, %s28
      %s22 = sphi 0, %s20
      %s23 = sphi 0, %s21
      %s24 = sphi 0, %s22
      %s25 = sphi 0, %s23
      %s35 = sphi 0, %s37
      %s38 = sphi 0, %s35
      %s39 = sphi 0, %s38
      %s55 = sphi 0, %s39
      %s61 = sphi 0, %s63
      %s64 = sphi 0, %s61
      %s65 = sphi 0, %s64
      %s81 = sphi 0, %s65
      %s87 = sphi 0, %s89
      %s90 = sphi 0, %s87
      %s91 = sphi 0, %s90
      %s107 = sphi 0, %s91
      %s113 = sphi 0, %s115
      %s116 = sphi 0, %s113
      %s117 = sphi 0, %s116
      %s133 = sphi 0, %s117
      %s141 = sphi 0, %s143
      %s144 = sphi 0, %s141
      %s145 = sphi 0, %s144
      %s161 = sphi 0, %s145
    $region4: #{fused_matmul.1} parent=1 // loop_header_branch
      %16 = sbr.rel (%p14) target = $region8
    $region5: #{fused_matmul.1} parent=1 // loop_body
      %s18 = ssub.s32 %s13, 1
      %s19 = ssub.s32 %s13, 2
      %s26 = sadd.s32 1, %s21
      %p27 = scmp.ge.s32.totalorder %s26, 4
      %s28 = scalar_select %p27, 0, %s26
      %s29 = sadd.s32 1, %s20
      %s30 = scalar_select %p27, %s29, %s20
      %p31 = scmp.ge.s32.totalorder %s30, 1
      %s32 = scalar_select %p31, 0, %s30
      %s33 = ssub.s32 %s21, %s28
      %p34 = scmp.eq.s32.totalorder %s33, 0
      %s36 = sadd.s32 %s35, 1
      %s37 = scalar_select %p34, %s35, %s36
      %p40 = pneg %p34
      %p41 = scmp.eq.s32.totalorder %s13, 3
      %p42 = por %p40, %p41
      %p43 = scmp.ne.s32.totalorder %s35, %s38
      %p44 = scmp.eq.s32.totalorder %s13, 0
      %p45 = por %p43, %p44
      %p46 = scmp.ne.s32.totalorder %s35, %s38
      %p47 = scmp.eq.s32.totalorder %s18, 3
      %p48 = por %p46, %p47
      %p49 = scmp.ne.s32.totalorder %s38, %s39
      %p50 = scmp.eq.s32.totalorder %s18, 0
      %p51 = por %p49, %p50
      %p52 = scmp.ne.s32.totalorder %s38, %s39
      %p53 = scmp.eq.s32.totalorder %s19, 3
      %p54 = por %p52, %p53
      %p56 = scmp.ne.s32.totalorder %s39, %s55
      %p57 = scmp.eq.s32.totalorder %s19, 0
      %p58 = por %p56, %p57
      %s59 = ssub.s32 %s20, %s32
      %p60 = scmp.eq.s32.totalorder %s59, 0
      %s62 = sadd.s32 %s61, 1
      %s63 = scalar_select %p60, %s61, %s62
      %p66 = pneg %p60
      %p67 = scmp.eq.s32.totalorder %s13, 3
      %p68 = por %p66, %p67
      %p69 = scmp.ne.s32.totalorder %s61, %s64
      %p70 = scmp.eq.s32.totalorder %s13, 0
      %p71 = por %p69, %p70
      %p72 = scmp.ne.s32.totalorder %s61, %s64
      %p73 = scmp.eq.s32.totalorder %s18, 3
      %p74 = por %p72, %p73
      %p75 = scmp.ne.s32.totalorder %s64, %s65
      %p76 = scmp.eq.s32.totalorder %s18, 0
      %p77 = por %p75, %p76
      %p78 = scmp.ne.s32.totalorder %s64, %s65
      %p79 = scmp.eq.s32.totalorder %s19, 3
      %p80 = por %p78, %p79
      %p82 = scmp.ne.s32.totalorder %s65, %s81
      %p83 = scmp.eq.s32.totalorder %s19, 0
      %p84 = por %p82, %p83
      %s85 = ssub.s32 %s20, %s32
      %p86 = scmp.eq.s32.totalorder %s85, 0
      %s88 = sadd.s32 %s87, 1
      %s89 = scalar_select %p86, %s87, %s88
      %p92 = pneg %p86
      %p93 = scmp.eq.s32.totalorder %s13, 3
      %p94 = por %p92, %p93
      %p95 = scmp.ne.s32.totalorder %s87, %s90
      %p96 = scmp.eq.s32.totalorder %s13, 0
      %p97 = por %p95, %p96
      %p98 = scmp.ne.s32.totalorder %s87, %s90
      %p99 = scmp.eq.s32.totalorder %s18, 3
      %p100 = por %p98, %p99
      %p101 = scmp.ne.s32.totalorder %s90, %s91
      %p102 = scmp.eq.s32.totalorder %s18, 0
      %p103 = por %p101, %p102
      %p104 = scmp.ne.s32.totalorder %s90, %s91
      %p105 = scmp.eq.s32.totalorder %s19, 3
      %p106 = por %p104, %p105
      %p108 = scmp.ne.s32.totalorder %s91, %s107
      %p109 = scmp.eq.s32.totalorder %s19, 0
      %p110 = por %p108, %p109
      %s111 = ssub.s32 %s20, %s32
      %p112 = scmp.eq.s32.totalorder %s111, 0
      %s114 = sadd.s32 %s113, 1
      %s115 = scalar_select %p112, %s113, %s114
      %p118 = pneg %p112
      %p119 = scmp.eq.s32.totalorder %s13, 3
      %p120 = por %p118, %p119
      %p121 = scmp.ne.s32.totalorder %s113, %s116
      %p122 = scmp.eq.s32.totalorder %s13, 0
      %p123 = por %p121, %p122
      %p124 = scmp.ne.s32.totalorder %s113, %s116
      %p125 = scmp.eq.s32.totalorder %s18, 3
      %p126 = por %p124, %p125
      %p127 = scmp.ne.s32.totalorder %s116, %s117
      %p128 = scmp.eq.s32.totalorder %s18, 0
      %p129 = por %p127, %p128
      %p130 = scmp.ne.s32.totalorder %s116, %s117
      %p131 = scmp.eq.s32.totalorder %s19, 3
      %p132 = por %p130, %p131
      %p134 = scmp.ne.s32.totalorder %s117, %s133
      %p135 = scmp.eq.s32.totalorder %s19, 0
      %p136 = por %p134, %p135
      %s137 = ssub.s32 %s21, %s28
      %s138 = ssub.s32 %s20, %s32
      %s139 = sor.u32 %s137, %s138
      %p140 = scmp.eq.s32.totalorder %s139, 0
      %s142 = sadd.s32 %s141, 1
      %s143 = scalar_select %p140, %s141, %s142
      %p146 = pneg %p140
      %p147 = scmp.eq.s32.totalorder %s13, 3
      %p148 = por %p146, %p147
      %p149 = scmp.ne.s32.totalorder %s141, %s144
      %p150 = scmp.eq.s32.totalorder %s13, 0
      %p151 = por %p149, %p150
      %p152 = scmp.ne.s32.totalorder %s141, %s144
      %p153 = scmp.eq.s32.totalorder %s18, 3
      %p154 = por %p152, %p153
      %p155 = scmp.ne.s32.totalorder %s144, %s145
      %p156 = scmp.eq.s32.totalorder %s18, 0
      %p157 = por %p155, %p156
      %p158 = scmp.ne.s32.totalorder %s144, %s145
      %p159 = scmp.eq.s32.totalorder %s19, 3
      %p160 = por %p158, %p159
      %p162 = scmp.ne.s32.totalorder %s145, %s161
      %p163 = scmp.eq.s32.totalorder %s19, 0
      %p164 = por %p162, %p163
      %p165 = scmp.le.s32.totalorder 1, %s13
      %p166 = scmp.lt.s32.totalorder %s13, 5
      %p167 = pnand %p165, %p166
      %p168 = pneg %p167
      // Predicated region
      $region9: #{fused_matmul.1} parent=5 // pred_check
        _
      $region10: #{fused_matmul.1} parent=5 // pred_check_branch
        %170 = sbr.rel (%p167) target = $region12
      $region11: #{fused_matmul.1} parent=5 // pred_region
        %s171 = ssub.s32 %s13, 1
        // Predicated region
        $region13: #{fused_matmul.1} parent=11 // pred_check
          %p172 = pneg %p77
        $region14: #{fused_matmul.1} parent=11 // pred_check_branch
          %174 = sbr.rel (%p172) target = $region16
        $region15: #{fused_matmul.1} parent=11 // pred_region
          %p175 = scmp.lt.s32.totalorder %s22, 0
          %s176 = scalar_select %p175, %s22, 0
          %s177 = smul.addr %s176, 4
          %s178 = scalar_lea.vmem %s1, %s177
        $region16: #{fused_matmul.1} parent=11 // pred_fallthru
          _
        // Predicated region
        $region17: #{fused_matmul.1} parent=11 // pred_check
          %p179 = pneg %p103
        $region18: #{fused_matmul.1} parent=11 // pred_check_branch
          %181 = sbr.rel (%p179) target = $region20
        $region19: #{fused_matmul.1} parent=11 // pred_region
          %p182 = scmp.lt.s32.totalorder %s22, 0
          %s183 = scalar_select %p182, %s22, 0
          %s184 = scalar_lea.vmem %s2, %s183
        $region20: #{fused_matmul.1} parent=11 // pred_fallthru
          _
        // Predicated region
        $region21: #{fused_matmul.1} parent=11 // pred_check
          %p185 = pneg %p129
        $region22: #{fused_matmul.1} parent=11 // pred_check_branch
          %187 = sbr.rel (%p185) target = $region24
        $region23: #{fused_matmul.1} parent=11 // pred_region
          %p188 = scmp.lt.s32.totalorder %s22, 0
          %s189 = scalar_select %p188, %s22, 0
          %s190 = scalar_lea.vmem %s3, %s189
        $region24: #{fused_matmul.1} parent=11 // pred_fallthru
          _
      $region12: #{fused_matmul.1} parent=5 // pred_fallthru
        _
      %p191 = scmp.lt.s32.totalorder %s13, 4
      // Predicated region
      $region25: #{fused_matmul.1} parent=5 // pred_check
        %p192 = pneg %p191
      $region26: #{fused_matmul.1} parent=5 // pred_check_branch
        %194 = sbr.rel (%p192) target = $region28
      $region27: #{fused_matmul.1} parent=5 // pred_region
        // Predicated region
        $region29: #{fused_matmul.1} parent=27 // pred_check
          %p195 = pneg %p45
        $region30: #{fused_matmul.1} parent=27 // pred_check_branch
          %197 = sbr.rel (%p195) target = $region32
        $region31: #{fused_matmul.1} parent=27 // pred_region
          %s198 = smul.u32 64, %s21
          %p199 = scmp.lt.s32.totalorder %s198, 255
          %s200 = scalar_select %p199, %s198, 255
          %s201 = smul.addr %s200, 2
          %s202 = smul.addr %s201, 4
          %s203 = scalar_lea.vmem %s0, %s202
          %s204 = smul.u32 64, %s21
        $region32: #{fused_matmul.1} parent=27 // pred_fallthru
          _
      $region28: #{fused_matmul.1} parent=5 // pred_fallthru
        _
      %p205 = scmp.le.s32.totalorder 1, %s13
      %p206 = scmp.lt.s32.totalorder %s13, 5
      %p207 = pnand %p205, %p206
      %p208 = pneg %p207
      // Predicated region
      $region33: #{fused_matmul.1} parent=5 // pred_check
        _
      $region34: #{fused_matmul.1} parent=5 // pred_check_branch
        %210 = sbr.rel (%p207) target = $region36
      $region35: #{fused_matmul.1} parent=5 // pred_region
        %s211 = ssub.s32 %s13, 1
        %s212 = smul.u32 64, %s23
        %p213 = scmp.lt.s32.totalorder %s212, 255
        %s214 = scalar_select %p213, %s212, 255
        %s215 = smul.addr %s214, 2
        %s216 = smul.addr %s215, 4
        %s217 = scalar_lea.vmem %s0, %s216
        %p218 = pneg %p51
        %p219 = pneg %p48
        %p220 = scmp.lt.s32.totalorder %s22, 0
        %s221 = scalar_select %p220, %s22, 0
        %s222 = smul.addr %s221, 4
        %s223 = scalar_lea.vmem %s1, %s222
        %p224 = pneg %p77
        %p225 = pneg %p74
        %p226 = scmp.lt.s32.totalorder %s22, 0
        %s227 = scalar_select %p226, %s22, 0
        %s228 = scalar_lea.vmem %s2, %s227
        %p229 = pneg %p103
        %p230 = pneg %p100
        %p231 = scmp.lt.s32.totalorder %s22, 0
        %s232 = scalar_select %p231, %s22, 0
        %s233 = scalar_lea.vmem %s3, %s232
        %p234 = pneg %p129
        %p235 = pneg %p126
        %p236 = pneg %p157
        %p237 = pneg %p154
        %s238 = sand.u32 %s144, 1
        %s239 = scalar_lea.sflag [#allocation3], %s238
        %s240 = sand.u32 %s144, 1
        %s241 = smul.addr %s240, 256
        %s242 = scalar_lea.vmem [#allocation2], %s241
        %s243 = smul.u32 64, %s23
        %p244 = scmp.lt.s32.totalorder %s243, 255
        %s245 = scalar_select %p244, %s243, 255
        %s246 = smul.addr %s245, 2
        %s247 = smul.addr %s246, 4
        %s248 = scalar_lea.vmem %s0, %s247
        %s249 = smul.u32 64, %s23
        %p250 = scmp.lt.s32.totalorder %s22, 0
        %s251 = scalar_select %p250, %s22, 0
        %s252 = smul.addr %s251, 4
        %s253 = scalar_lea.vmem %s1, %s252
        %p254 = scmp.lt.s32.totalorder %s22, 0
        %s255 = scalar_select %p254, %s22, 0
        %s256 = scalar_lea.vmem %s2, %s255
        %p257 = scmp.lt.s32.totalorder %s22, 0
        %s258 = scalar_select %p257, %s22, 0
        %s259 = scalar_lea.vmem %s3, %s258
        %s260 = smul.u32 64, %s23
        %v262 = vld [vmem:[%s248] sm:$0xff]
        %v263 = vld [vmem:[%s248 + $0x8] sm:$0xff]
        %v264 = vld [vmem:[%s248 + $0x10] sm:$0xff]
        %v265 = vld [vmem:[%s248 + $0x18] sm:$0xff]
        %v266 = vld [vmem:[%s248 + $0x20] sm:$0xff]
        %v267 = vld [vmem:[%s248 + $0x28] sm:$0xff]
        %v268 = vld [vmem:[%s248 + $0x30] sm:$0xff]
        %v269 = vld [vmem:[%s248 + $0x38] sm:$0xff]
        %v270 = vld [vmem:[%s248 + $0x40] sm:$0xff]
        %v271 = vld [vmem:[%s248 + $0x48] sm:$0xff]
        %v272 = vld [vmem:[%s248 + $0x50] sm:$0xff]
        %v273 = vld [vmem:[%s248 + $0x58] sm:$0xff]
        %v274 = vld [vmem:[%s248 + $0x60] sm:$0xff]
        %v275 = vld [vmem:[%s248 + $0x68] sm:$0xff]
        %v276 = vld [vmem:[%s248 + $0x70] sm:$0xff]
        %v277 = vld [vmem:[%s248 + $0x78] sm:$0xff]
        %v278 = vld [vmem:[%s248 + $0x80] sm:$0xff]
        %v279 = vld [vmem:[%s248 + $0x88] sm:$0xff]
        %v280 = vld [vmem:[%s248 + $0x90] sm:$0xff]
        %v281 = vld [vmem:[%s248 + $0x98] sm:$0xff]
        %v282 = vld [vmem:[%s248 + $0xa0] sm:$0xff]
        %v283 = vld [vmem:[%s248 + $0xa8] sm:$0xff]
        %v284 = vld [vmem:[%s248 + $0xb0] sm:$0xff]
        %v285 = vld [vmem:[%s248 + $0xb8] sm:$0xff]
        %v286 = vld [vmem:[%s248 + $0xc0] sm:$0xff]
        %v287 = vld [vmem:[%s248 + $0xc8] sm:$0xff]
        %v288 = vld [vmem:[%s248 + $0xd0] sm:$0xff]
        %v289 = vld [vmem:[%s248 + $0xd8] sm:$0xff]
        %v290 = vld [vmem:[%s248 + $0xe0] sm:$0xff]
        %v291 = vld [vmem:[%s248 + $0xe8] sm:$0xff]
        %v292 = vld [vmem:[%s248 + $0xf0] sm:$0xff]
        %v293 = vld [vmem:[%s248 + $0xf8] sm:$0xff]
        %v294 = vld [vmem:[%s248 + $0x100] sm:$0xff]
        %v295 = vld [vmem:[%s248 + $0x108] sm:$0xff]
        %v296 = vld [vmem:[%s248 + $0x110] sm:$0xff]
        %v297 = vld [vmem:[%s248 + $0x118] sm:$0xff]
        %v298 = vld [vmem:[%s248 + $0x120] sm:$0xff]
        %v299 = vld [vmem:[%s248 + $0x128] sm:$0xff]
        %v300 = vld [vmem:[%s248 + $0x130] sm:$0xff]
        %v301 = vld [vmem:[%s248 + $0x138] sm:$0xff]
        %v302 = vld [vmem:[%s248 + $0x140] sm:$0xff]
        %v303 = vld [vmem:[%s248 + $0x148] sm:$0xff]
        %v304 = vld [vmem:[%s248 + $0x150] sm:$0xff]
        %v305 = vld [vmem:[%s248 + $0x158] sm:$0xff]
        %v306 = vld [vmem:[%s248 + $0x160] sm:$0xff]
        %v307 = vld [vmem:[%s248 + $0x168] sm:$0xff]
        %v308 = vld [vmem:[%s248 + $0x170] sm:$0xff]
        %v309 = vld [vmem:[%s248 + $0x178] sm:$0xff]
        %v310 = vld [vmem:[%s248 + $0x180] sm:$0xff]
        %v311 = vld [vmem:[%s248 + $0x188] sm:$0xff]
        %v312 = vld [vmem:[%s248 + $0x190] sm:$0xff]
        %v313 = vld [vmem:[%s248 + $0x198] sm:$0xff]
        %v314 = vld [vmem:[%s248 + $0x1a0] sm:$0xff]
        %v315 = vld [vmem:[%s248 + $0x1a8] sm:$0xff]
        %v316 = vld [vmem:[%s248 + $0x1b0] sm:$0xff]
        %v317 = vld [vmem:[%s248 + $0x1b8] sm:$0xff]
        %v318 = vld [vmem:[%s248 + $0x1c0] sm:$0xff]
        %v319 = vld [vmem:[%s248 + $0x1c8] sm:$0xff]
        %v320 = vld [vmem:[%s248 + $0x1d0] sm:$0xff]
        %v321 = vld [vmem:[%s248 + $0x1d8] sm:$0xff]
        %v322 = vld [vmem:[%s248 + $0x1e0] sm:$0xff]
        %v323 = vld [vmem:[%s248 + $0x1e8] sm:$0xff]
        %v324 = vld [vmem:[%s248 + $0x1f0] sm:$0xff]
        %v325 = vld [vmem:[%s248 + $0x1f8] sm:$0xff]
        %v326 = vld [vmem:[%s253] sm:$0xf]
        %v327 = vld [vmem:[%s253 + $0x4] sm:$0xf]
        %v328 = vld [vmem:[%s253 + $0x8] sm:$0xf]
        %v329 = vld [vmem:[%s253 + $0xc] sm:$0xf]
        %v330 = vld [vmem:[%s253 + $0x10] sm:$0xf]
        %v331 = vld [vmem:[%s253 + $0x14] sm:$0xf]
        %v332 = vld [vmem:[%s253 + $0x18] sm:$0xf]
        %v333 = vld [vmem:[%s253 + $0x1c] sm:$0xf]
        %v334 = vld [vmem:[%s253 + $0x20] sm:$0xf]
        %v335 = vld [vmem:[%s253 + $0x24] sm:$0xf]
        %v336 = vld [vmem:[%s253 + $0x28] sm:$0xf]
        %v337 = vld [vmem:[%s253 + $0x2c] sm:$0xf]
        %v338 = vld [vmem:[%s253 + $0x30] sm:$0xf]
        %v339 = vld [vmem:[%s253 + $0x34] sm:$0xf]
        %v340 = vld [vmem:[%s253 + $0x38] sm:$0xf]
        %v341 = vld [vmem:[%s253 + $0x3c] sm:$0xf]
        %v342 = vld [vmem:[%s253 + $0x40] sm:$0xf]
        %v343 = vld [vmem:[%s253 + $0x44] sm:$0xf]
        %v344 = vld [vmem:[%s253 + $0x48] sm:$0x3]
        %v409 = vunpack.c.l.b16 %v262
        %v410 = vunpack.c.h.b16 %v262
        %v411 = vunpack.c.l.b16 %v263
        %v412 = vunpack.c.h.b16 %v263
        %v413 = vunpack.c.l.b16 %v264
        %v414 = vunpack.c.h.b16 %v264
        %v415 = vunpack.c.l.b16 %v265
        %v416 = vunpack.c.h.b16 %v265
        %v417 = vunpack.c.l.b16 %v266
        %v418 = vunpack.c.h.b16 %v266
        %v419 = vunpack.c.l.b16 %v267
        %v420 = vunpack.c.h.b16 %v267
        %v421 = vunpack.c.l.b16 %v268
        %v422 = vunpack.c.h.b16 %v268
        %v423 = vunpack.c.l.b16 %v269
        %v424 = vunpack.c.h.b16 %v269
        %v425 = vunpack.c.l.b16 %v270
        %v426 = vunpack.c.h.b16 %v270
        %v427 = vunpack.c.l.b16 %v271
        %v428 = vunpack.c.h.b16 %v271
        %v429 = vunpack.c.l.b16 %v272
        %v430 = vunpack.c.h.b16 %v272
        %v431 = vunpack.c.l.b16 %v273
        %v432 = vunpack.c.h.b16 %v273
        %v433 = vunpack.c.l.b16 %v274
        %v434 = vunpack.c.h.b16 %v274
        %v435 = vunpack.c.l.b16 %v275
        %v436 = vunpack.c.h.b16 %v275
        %v437 = vunpack.c.l.b16 %v276
        %v438 = vunpack.c.h.b16 %v276
        %v439 = vunpack.c.l.b16 %v277
        %v440 = vunpack.c.h.b16 %v277
        %v441 = vunpack.c.l.b16 %v278
        %v442 = vunpack.c.h.b16 %v278
        %v443 = vunpack.c.l.b16 %v279
        %v444 = vunpack.c.h.b16 %v279
        %v445 = vunpack.c.l.b16 %v280
        %v446 = vunpack.c.h.b16 %v280
        %v447 = vunpack.c.l.b16 %v281
        %v448 = vunpack.c.h.b16 %v281
        %v449 = vunpack.c.l.b16 %v282
        %v450 = vunpack.c.h.b16 %v282
        %v451 = vunpack.c.l.b16 %v283
        %v452 = vunpack.c.h.b16 %v283
        %v453 = vunpack.c.l.b16 %v284
        %v454 = vunpack.c.h.b16 %v284
        %v455 = vunpack.c.l.b16 %v285
        %v456 = vunpack.c.h.b16 %v285
        %v457 = vunpack.c.l.b16 %v286
        %v458 = vunpack.c.h.b16 %v286
        %v459 = vunpack.c.l.b16 %v287
        %v460 = vunpack.c.h.b16 %v287
        %v461 = vunpack.c.l.b16 %v288
        %v462 = vunpack.c.h.b16 %v288
        %v463 = vunpack.c.l.b16 %v289
        %v464 = vunpack.c.h.b16 %v289
        %v465 = vunpack.c.l.b16 %v290
        %v466 = vunpack.c.h.b16 %v290
        %v467 = vunpack.c.l.b16 %v291
        %v468 = vunpack.c.h.b16 %v291
        %v469 = vunpack.c.l.b16 %v292
        %v470 = vunpack.c.h.b16 %v292
        %v471 = vunpack.c.l.b16 %v293
        %v472 = vunpack.c.h.b16 %v293
        %v473 = vunpack.c.l.b16 %v294
        %v474 = vunpack.c.h.b16 %v294
        %v475 = vunpack.c.l.b16 %v295
        %v476 = vunpack.c.h.b16 %v295
        %v477 = vunpack.c.l.b16 %v296
        %v478 = vunpack.c.h.b16 %v296
        %v479 = vunpack.c.l.b16 %v297
        %v480 = vunpack.c.h.b16 %v297
        %v481 = vunpack.c.l.b16 %v298
        %v482 = vunpack.c.h.b16 %v298
        %v483 = vunpack.c.l.b16 %v299
        %v484 = vunpack.c.h.b16 %v299
        %v485 = vunpack.c.l.b16 %v300
        %v486 = vunpack.c.h.b16 %v300
        %v487 = vunpack.c.l.b16 %v301
        %v488 = vunpack.c.h.b16 %v301
        %v489 = vunpack.c.l.b16 %v302
        %v490 = vunpack.c.h.b16 %v302
        %v491 = vunpack.c.l.b16 %v303
        %v492 = vunpack.c.h.b16 %v303
        %v493 = vunpack.c.l.b16 %v304
        %v494 = vunpack.c.h.b16 %v304
        %v495 = vunpack.c.l.b16 %v305
        %v496 = vunpack.c.h.b16 %v305
        %v497 = vunpack.c.l.b16 %v306
        %v498 = vunpack.c.h.b16 %v306
        %v499 = vunpack.c.l.b16 %v307
        %v500 = vunpack.c.h.b16 %v307
        %v501 = vunpack.c.l.b16 %v308
        %v502 = vunpack.c.h.b16 %v308
        %v503 = vunpack.c.l.b16 %v309
        %v504 = vunpack.c.h.b16 %v309
        %v505 = vunpack.c.l.b16 %v310
        %v506 = vunpack.c.h.b16 %v310
        %v507 = vunpack.c.l.b16 %v311
        %v508 = vunpack.c.h.b16 %v311
        %v509 = vunpack.c.l.b16 %v312
        %v510 = vunpack.c.h.b16 %v312
        %v511 = vunpack.c.l.b16 %v313
        %v512 = vunpack.c.h.b16 %v313
        %v513 = vunpack.c.l.b16 %v314
        %v514 = vunpack.c.h.b16 %v314
        %v515 = vunpack.c.l.b16 %v315
        %v516 = vunpack.c.h.b16 %v315
        %v517 = vunpack.c.l.b16 %v316
        %v518 = vunpack.c.h.b16 %v316
        %v519 = vunpack.c.l.b16 %v317
        %v520 = vunpack.c.h.b16 %v317
        %v521 = vunpack.c.l.b16 %v318
        %v522 = vunpack.c.h.b16 %v318
        %v523 = vunpack.c.l.b16 %v319
        %v524 = vunpack.c.h.b16 %v319
        %v525 = vunpack.c.l.b16 %v320
        %v526 = vunpack.c.h.b16 %v320
        %v527 = vunpack.c.l.b16 %v321
        %v528 = vunpack.c.h.b16 %v321
        %v529 = vunpack.c.l.b16 %v322
        %v530 = vunpack.c.h.b16 %v322
        %v531 = vunpack.c.l.b16 %v323
        %v532 = vunpack.c.h.b16 %v323
        %v533 = vunpack.c.l.b16 %v324
        %v534 = vunpack.c.h.b16 %v324
        %v535 = vunpack.c.l.b16 %v325
        %v536 = vunpack.c.h.b16 %v325
        %v537 = vpack.c.b16 %v411, %v409
        %v538 = vpack.c.b16 %v412, %v410
        %v539 = vpack.c.b16 %v415, %v413
        %v540 = vpack.c.b16 %v416, %v414
        %v541 = vpack.c.b16 %v419, %v417
        %v542 = vpack.c.b16 %v420, %v418
        %v543 = vpack.c.b16 %v423, %v421
        %v544 = vpack.c.b16 %v424, %v422
        %v545 = vpack.c.b16 %v427, %v425
        %v546 = vpack.c.b16 %v428, %v426
        %v547 = vpack.c.b16 %v431, %v429
        %v548 = vpack.c.b16 %v432, %v430
        %v549 = vpack.c.b16 %v435, %v433
        %v550 = vpack.c.b16 %v436, %v434
        %v551 = vpack.c.b16 %v439, %v437
        %v552 = vpack.c.b16 %v440, %v438
        %v553 = vpack.c.b16 %v443, %v441
        %v554 = vpack.c.b16 %v444, %v442
        %v555 = vpack.c.b16 %v447, %v445
        %v556 = vpack.c.b16 %v448, %v446
        %v557 = vpack.c.b16 %v451, %v449
        %v558 = vpack.c.b16 %v452, %v450
        %v559 = vpack.c.b16 %v455, %v453
        %v560 = vpack.c.b16 %v456, %v454
        %v561 = vpack.c.b16 %v459, %v457
        %v562 = vpack.c.b16 %v460, %v458
        %v563 = vpack.c.b16 %v463, %v461
        %v564 = vpack.c.b16 %v464, %v462
        %v565 = vpack.c.b16 %v467, %v465
        %v566 = vpack.c.b16 %v468, %v466
        %v567 = vpack.c.b16 %v471, %v469
        %v568 = vpack.c.b16 %v472, %v470
        %v569 = vpack.c.b16 %v475, %v473
        %v570 = vpack.c.b16 %v476, %v474
        %v571 = vpack.c.b16 %v479, %v477
        %v572 = vpack.c.b16 %v480, %v478
        %v573 = vpack.c.b16 %v483, %v481
        %v574 = vpack.c.b16 %v484, %v482
        %v575 = vpack.c.b16 %v487, %v485
        %v576 = vpack.c.b16 %v488, %v486
        %v577 = vpack.c.b16 %v491, %v489
        %v578 = vpack.c.b16 %v492, %v490
        %v579 = vpack.c.b16 %v495, %v493
        %v580 = vpack.c.b16 %v496, %v494
        %v581 = vpack.c.b16 %v499, %v497
        %v582 = vpack.c.b16 %v500, %v498
        %v583 = vpack.c.b16 %v503, %v501
        %v584 = vpack.c.b16 %v504, %v502
        %v585 = vpack.c.b16 %v507, %v505
        %v586 = vpack.c.b16 %v508, %v506
        %v587 = vpack.c.b16 %v511, %v509
        %v588 = vpack.c.b16 %v512, %v510
        %v589 = vpack.c.b16 %v515, %v513
        %v590 = vpack.c.b16 %v516, %v514
        %v591 = vpack.c.b16 %v519, %v517
        %v592 = vpack.c.b16 %v520, %v518
        %v593 = vpack.c.b16 %v523, %v521
        %v594 = vpack.c.b16 %v524, %v522
        %v595 = vpack.c.b16 %v527, %v525
        %v596 = vpack.c.b16 %v528, %v526
        %v597 = vpack.c.b16 %v531, %v529
        %v598 = vpack.c.b16 %v532, %v530
        %v599 = vpack.c.b16 %v535, %v533
        %v600 = vpack.c.b16 %v536, %v534
        %v652 = vunpack.c.l.b16 %v326
        %v653 = vunpack.c.l.b16 %v327
        %v654 = vunpack.c.l.b16 %v328
        %v655 = vunpack.c.l.b16 %v329
        %v656 = vunpack.c.l.b16 %v330
        %v657 = vunpack.c.l.b16 %v331
        %v658 = vunpack.c.l.b16 %v332
        %v659 = vunpack.c.l.b16 %v333
        %v660 = vunpack.c.l.b16 %v334
        %v661 = vunpack.c.l.b16 %v335
        %v662 = vunpack.c.l.b16 %v336
        %v663 = vunpack.c.l.b16 %v337
        %v664 = vunpack.c.l.b16 %v338
        %v665 = vunpack.c.l.b16 %v339
        %v666 = vunpack.c.l.b16 %v340
        %v667 = vunpack.c.l.b16 %v341
        %v668 = vunpack.c.l.b16 %v342
        %v669 = vunpack.c.l.b16 %v343
        %v670 = vunpack.c.l.b16 %v344
        %v671 = vpack.c.b16 %v653, %v652
        %v672 = vpack.c.b16 %v655, %v654
        %v673 = vpack.c.b16 %v657, %v656
        %v674 = vpack.c.b16 %v659, %v658
        %v675 = vpack.c.b16 %v661, %v660
        %v676 = vpack.c.b16 %v663, %v662
        %v677 = vpack.c.b16 %v665, %v664
        %v678 = vpack.c.b16 %v667, %v666
        %v679 = vpack.c.b16 %v669, %v668
        %v680 = vpack.c.b16 %v670, %v670
        %vm690 = vcmask 154624
        %v692 = vsel %vm690, %v538, 0
        %v695 = vsel %vm690, %v540, 0
        %v698 = vsel %vm690, %v542, 0
        %v701 = vsel %vm690, %v544, 0
        %v704 = vsel %vm690, %v546, 0
        %v707 = vsel %vm690, %v548, 0
        %v710 = vsel %vm690, %v550, 0
        %v713 = vsel %vm690, %v552, 0
        %v716 = vsel %vm690, %v554, 0
        %v719 = vsel %vm690, %v556, 0
        %v722 = vsel %vm690, %v558, 0
        %v725 = vsel %vm690, %v560, 0
        %v728 = vsel %vm690, %v562, 0
        %v731 = vsel %vm690, %v564, 0
        %v734 = vsel %vm690, %v566, 0
        %v737 = vsel %vm690, %v568, 0
        %v740 = vsel %vm690, %v570, 0
        %v743 = vsel %vm690, %v572, 0
        %v746 = vsel %vm690, %v574, 0
        %v749 = vsel %vm690, %v576, 0
        %v752 = vsel %vm690, %v578, 0
        %v755 = vsel %vm690, %v580, 0
        %v758 = vsel %vm690, %v582, 0
        %v761 = vsel %vm690, %v584, 0
        %v764 = vsel %vm690, %v586, 0
        %v767 = vsel %vm690, %v588, 0
        %v770 = vsel %vm690, %v590, 0
        %v773 = vsel %vm690, %v592, 0
        %v776 = vsel %vm690, %v594, 0
        %v779 = vsel %vm690, %v596, 0
        %v782 = vsel %vm690, %v598, 0
        %v785 = vsel %vm690, %v600, 0
        %vm787 = vcmask 1040384
        %vm788 = vcmask 1041408
        %v789 = vsel %vm787, 4294967295, 65535
        %v790 = vsel %vm788, %v789, 0
        %v792 = vand.u32 %v680, %v790
        %794 = vmatprep.subr.bf16.mxu0 0
        %795 = vmatpush1.bf16.msra.mxu0 %v671
        %796 = vmatprep.subr.bf16.mxu0 0
        %797 = vmatpush1.bf16.msra.mxu0 %v672
        %798 = vmatprep.subr.bf16.mxu0 0
        %799 = vmatpush1.bf16.msra.mxu0 %v673
        %800 = vmatprep.subr.bf16.mxu0 0
        %801 = vmatpush1.bf16.msra.mxu0 %v674
        %802 = vmatprep.subr.bf16.mxu0 0
        %803 = vmatpush1.bf16.msra.mxu0 %v675
        %804 = vmatprep.subr.bf16.mxu0 0
        %805 = vmatpush1.bf16.msra.mxu0 %v676
        %806 = vmatprep.subr.bf16.mxu0 0
        %807 = vmatpush1.bf16.msra.mxu0 %v677
        %808 = vmatprep.subr.bf16.mxu0 0
        %809 = vmatpush1.bf16.msra.mxu0 %v678
        %810 = vmatprep.subr.bf16.mxu0 0
        %811 = vmatpush1.bf16.msra.mxu0 %v679
        %812 = vmatprep.subr.bf16.mxu0 0
        %813 = vmatpush1.bf16.msra.mxu0 %v792
        %814 = vmatprep.subr.bf16.mxu0 0
        %815 = vmatpush1.bf16.msra.mxu0 0
        %816 = vmatprep.subr.bf16.mxu0 0
        %817 = vmatpush1.bf16.msra.mxu0 0
        %818 = vmatprep.subr.bf16.mxu0 0
        %819 = vmatpush1.bf16.msra.mxu0 0
        %820 = vmatprep.subr.bf16.mxu0 0
        %821 = vmatpush1.bf16.msra.mxu0 0
        %822 = vmatprep.subr.bf16.mxu0 0
        %823 = vmatpush1.bf16.msra.mxu0 0
        %824 = vmatprep.subr.bf16.mxu0 0
        %825 = vmatpush1.bf16.msra.mxu0 0
        %826 = vmatprep.mubr.bf16.mxu0 %v692
        %827 = vmatmul.mubr.bf16.gmra.mrb[0].mxu0 %v537
        %v828 = vpop.f32.mrb[0].mxu0
        %v829 = vadd.f32 0.0, %v828
        %v830 = vpop.f32.mrb[0].mxu0
        %v831 = vpop.f32.mrb[0].mxu0
        %v832 = vadd.f32 0.0, %v831
        %v833 = vpop.f32.mrb[0].mxu0
        %834 = vmatprep.mubr.bf16.mxu0 %v695
        %835 = vmatmul.mubr.bf16.gmra.mrb[0].mxu0 %v539
        %v836 = vpop.f32.mrb[0].mxu0
        %v837 = vadd.f32 0.0, %v836
        %v838 = vpop.f32.mrb[0].mxu0
        %v839 = vpop.f32.mrb[0].mxu0
        %v840 = vadd.f32 0.0, %v839
        %v841 = vpop.f32.mrb[0].mxu0
        %842 = vmatprep.mubr.bf16.mxu0 %v698
        %843 = vmatmul.mubr.bf16.gmra.mrb[0].mxu0 %v541
        %v844 = vpop.f32.mrb[0].mxu0
        %v845 = vadd.f32 0.0, %v844
        %v846 = vpop.f32.mrb[0].mxu0
        %v847 = vpop.f32.mrb[0].mxu0
        %v848 = vadd.f32 0.0, %v847
        %v849 = vpop.f32.mrb[0].mxu0
        %850 = vmatprep.mubr.bf16.mxu0 %v701
        %851 = vmatmul.mubr.bf16.gmra.mrb[0].mxu0 %v543
        %v852 = vpop.f32.mrb[0].mxu0
        %v853 = vadd.f32 0.0, %v852
        %v854 = vpop.f32.mrb[0].mxu0
        %v855 = vpop.f32.mrb[0].mxu0
        %v856 = vadd.f32 0.0, %v855
        %v857 = vpop.f32.mrb[0].mxu0
        %858 = vmatprep.mubr.bf16.mxu0 %v704
        %859 = vmatmul.mubr.bf16.gmra.mrb[0].mxu0 %v545
        %v860 = vpop.f32.mrb[0].mxu0
        %v861 = vadd.f32 0.0, %v860
        %v862 = vpop.f32.mrb[0].mxu0
        %v863 = vpop.f32.mrb[0].mxu0
        %v864 = vadd.f32 0.0, %v863
        %v865 = vpop.f32.mrb[0].mxu0
        %866 = vmatprep.mubr.bf16.mxu0 %v707
        %867 = vmatmul.mubr.bf16.gmra.mrb[0].mxu0 %v547
        %v868 = vpop.f32.mrb[0].mxu0
        %v869 = vadd.f32 0.0, %v868
        %v870 = vpop.f32.mrb[0].mxu0
        %v871 = vpop.f32.mrb[0].mxu0
        %v872 = vadd.f32 0.0, %v871
        %v873 = vpop.f32.mrb[0].mxu0
        %874 = vmatprep.mubr.bf16.mxu0 %v710
        %875 = vmatmul.mubr.bf16.gmra.mrb[0].mxu0 %v549
        %v876 = vpop.f32.mrb[0].mxu0
        %v877 = vadd.f32 0.0, %v876
        %v878 = vpop.f32.mrb[0].mxu0
        %v879 = vpop.f32.mrb[0].mxu0
        %v880 = vadd.f32 0.0, %v879
        %v881 = vpop.f32.mrb[0].mxu0
        %882 = vmatprep.mubr.bf16.mxu0 %v713
        %883 = vmatmul.mubr.bf16.gmra.mrb[0].mxu0 %v551
        %v884 = vpop.f32.mrb[0].mxu0
        %v885 = vadd.f32 0.0, %v884
        %v886 = vpop.f32.mrb[0].mxu0
        %v887 = vpop.f32.mrb[0].mxu0
        %v888 = vadd.f32 0.0, %v887
        %v889 = vpop.f32.mrb[0].mxu0
        %890 = vmatprep.mubr.bf16.mxu0 %v716
        %891 = vmatmul.mubr.bf16.gmra.mrb[0].mxu0 %v553
        %v892 = vpop.f32.mrb[0].mxu0
        %v893 = vadd.f32 0.0, %v892
        %v894 = vpop.f32.mrb[0].mxu0
        %v895 = vpop.f32.mrb[0].mxu0
        %v896 = vadd.f32 0.0, %v895
        %v897 = vpop.f32.mrb[0].mxu0
        %898 = vmatprep.mubr.bf16.mxu0 %v719
        %899 = vmatmul.mubr.bf16.gmra.mrb[0].mxu0 %v555
        %v900 = vpop.f32.mrb[0].mxu0
        %v901 = vadd.f32 0.0, %v900
        %v902 = vpop.f32.mrb[0].mxu0
        %v903 = vpop.f32.mrb[0].mxu0
        %v904 = vadd.f32 0.0, %v903
        %v905 = vpop.f32.mrb[0].mxu0
        %906 = vmatprep.mubr.bf16.mxu0 %v722
        %907 = vmatmul.mubr.bf16.gmra.mrb[0].mxu0 %v557
        %v908 = vpop.f32.mrb[0].mxu0
        %v909 = vadd.f32 0.0, %v908
        %v910 = vpop.f32.mrb[0].mxu0
        %v911 = vpop.f32.mrb[0].mxu0
        %v912 = vadd.f32 0.0, %v911
        %v913 = vpop.f32.mrb[0].mxu0
        %914 = vmatprep.mubr.bf16.mxu0 %v725
        %915 = vmatmul.mubr.bf16.gmra.mrb[0].mxu0 %v559
        %v916 = vpop.f32.mrb[0].mxu0
        %v917 = vadd.f32 0.0, %v916
        %v918 = vpop.f32.mrb[0].mxu0
        %v919 = vpop.f32.mrb[0].mxu0
        %v920 = vadd.f32 0.0, %v919
        %v921 = vpop.f32.mrb[0].mxu0
        %922 = vmatprep.mubr.bf16.mxu0 %v728
        %923 = vmatmul.mubr.bf16.gmra.mrb[0].mxu0 %v561
        %v924 = vpop.f32.mrb[0].mxu0
        %v925 = vadd.f32 0.0, %v924
        %v926 = vpop.f32.mrb[0].mxu0
        %v927 = vpop.f32.mrb[0].mxu0
        %v928 = vadd.f32 0.0, %v927
        %v929 = vpop.f32.mrb[0].mxu0
        %930 = vmatprep.mubr.bf16.mxu0 %v731
        %931 = vmatmul.mubr.bf16.gmra.mrb[0].mxu0 %v563
        %v932 = vpop.f32.mrb[0].mxu0
        %v933 = vadd.f32 0.0, %v932
        %v934 = vpop.f32.mrb[0].mxu0
        %v935 = vpop.f32.mrb[0].mxu0
        %v936 = vadd.f32 0.0, %v935
        %v937 = vpop.f32.mrb[0].mxu0
        %938 = vmatprep.mubr.bf16.mxu0 %v734
        %939 = vmatmul.mubr.bf16.gmra.mrb[0].mxu0 %v565
        %v940 = vpop.f32.mrb[0].mxu0
        %v941 = vadd.f32 0.0, %v940
        %v942 = vpop.f32.mrb[0].mxu0
        %v943 = vpop.f32.mrb[0].mxu0
        %v944 = vadd.f32 0.0, %v943
        %v945 = vpop.f32.mrb[0].mxu0
        %946 = vmatprep.mubr.bf16.mxu0 %v737
        %947 = vmatmul.mubr.bf16.gmra.mrb[0].mxu0 %v567
        %v948 = vpop.f32.mrb[0].mxu0
        %v949 = vadd.f32 0.0, %v948
        %v950 = vpop.f32.mrb[0].mxu0
        %v951 = vpop.f32.mrb[0].mxu0
        %v952 = vadd.f32 0.0, %v951
        %v953 = vpop.f32.mrb[0].mxu0
        %954 = vmatprep.mubr.bf16.mxu0 %v740
        %955 = vmatmul.mubr.bf16.gmra.mrb[0].mxu0 %v569
        %v956 = vpop.f32.mrb[0].mxu0
        %v957 = vadd.f32 0.0, %v956
        %v958 = vpop.f32.mrb[0].mxu0
        %v959 = vpop.f32.mrb[0].mxu0
        %v960 = vadd.f32 0.0, %v959
        %v961 = vpop.f32.mrb[0].mxu0
        %962 = vmatprep.mubr.bf16.mxu0 %v743
        %963 = vmatmul.mubr.bf16.gmra.mrb[0].mxu0 %v571
        %v964 = vpop.f32.mrb[0].mxu0
        %v965 = vadd.f32 0.0, %v964
        %v966 = vpop.f32.mrb[0].mxu0
        %v967 = vpop.f32.mrb[0].mxu0
        %v968 = vadd.f32 0.0, %v967
        %v969 = vpop.f32.mrb[0].mxu0
        %970 = vmatprep.mubr.bf16.mxu0 %v746
        %971 = vmatmul.mubr.bf16.gmra.mrb[0].mxu0 %v573
        %v972 = vpop.f32.mrb[0].mxu0
        %v973 = vadd.f32 0.0, %v972
        %v974 = vpop.f32.mrb[0].mxu0
        %v975 = vpop.f32.mrb[0].mxu0
        %v976 = vadd.f32 0.0, %v975
        %v977 = vpop.f32.mrb[0].mxu0
        %978 = vmatprep.mubr.bf16.mxu0 %v749
        %979 = vmatmul.mubr.bf16.gmra.mrb[0].mxu0 %v575
        %v980 = vpop.f32.mrb[0].mxu0
        %v981 = vadd.f32 0.0, %v980
        %v982 = vpop.f32.mrb[0].mxu0
        %v983 = vpop.f32.mrb[0].mxu0
        %v984 = vadd.f32 0.0, %v983
        %v985 = vpop.f32.mrb[0].mxu0
        %986 = vmatprep.mubr.bf16.mxu0 %v752
        %987 = vmatmul.mubr.bf16.gmra.mrb[0].mxu0 %v577
        %v988 = vpop.f32.mrb[0].mxu0
        %v989 = vadd.f32 0.0, %v988
        %v990 = vpop.f32.mrb[0].mxu0
        %v991 = vpop.f32.mrb[0].mxu0
        %v992 = vadd.f32 0.0, %v991
        %v993 = vpop.f32.mrb[0].mxu0
        %994 = vmatprep.mubr.bf16.mxu0 %v755
        %995 = vmatmul.mubr.bf16.gmra.mrb[0].mxu0 %v579
        %v996 = vpop.f32.mrb[0].mxu0
        %v997 = vadd.f32 0.0, %v996
        %v998 = vpop.f32.mrb[0].mxu0
        %v999 = vpop.f32.mrb[0].mxu0
        %v1000 = vadd.f32 0.0, %v999
        %v1001 = vpop.f32.mrb[0].mxu0
        %1002 = vmatprep.mubr.bf16.mxu0 %v758
        %1003 = vmatmul.mubr.bf16.gmra.mrb[0].mxu0 %v581
        %v1004 = vpop.f32.mrb[0].mxu0
        %v1005 = vadd.f32 0.0, %v1004
        %v1006 = vpop.f32.mrb[0].mxu0
        %v1007 = vpop.f32.mrb[0].mxu0
        %v1008 = vadd.f32 0.0, %v1007
        %v1009 = vpop.f32.mrb[0].mxu0
        %1010 = vmatprep.mubr.bf16.mxu0 %v761
        %1011 = vmatmul.mubr.bf16.gmra.mrb[0].mxu0 %v583
        %v1012 = vpop.f32.mrb[0].mxu0
        %v1013 = vadd.f32 0.0, %v1012
        %v1014 = vpop.f32.mrb[0].mxu0
        %v1015 = vpop.f32.mrb[0].mxu0
        %v1016 = vadd.f32 0.0, %v1015
        %v1017 = vpop.f32.mrb[0].mxu0
        %1018 = vmatprep.mubr.bf16.mxu0 %v764
        %1019 = vmatmul.mubr.bf16.gmra.mrb[0].mxu0 %v585
        %v1020 = vpop.f32.mrb[0].mxu0
        %v1021 = vadd.f32 0.0, %v1020
        %v1022 = vpop.f32.mrb[0].mxu0
        %v1023 = vpop.f32.mrb[0].mxu0
        %v1024 = vadd.f32 0.0, %v1023
        %v1025 = vpop.f32.mrb[0].mxu0
        %1026 = vmatprep.mubr.bf16.mxu0 %v767
        %1027 = vmatmul.mubr.bf16.gmra.mrb[0].mxu0 %v587
        %v1028 = vpop.f32.mrb[0].mxu0
        %v1029 = vadd.f32 0.0, %v1028
        %v1030 = vpop.f32.mrb[0].mxu0
        %v1031 = vpop.f32.mrb[0].mxu0
        %v1032 = vadd.f32 0.0, %v1031
        %v1033 = vpop.f32.mrb[0].mxu0
        %1034 = vmatprep.mubr.bf16.mxu0 %v770
        %1035 = vmatmul.mubr.bf16.gmra.mrb[0].mxu0 %v589
        %v1036 = vpop.f32.mrb[0].mxu0
        %v1037 = vadd.f32 0.0, %v1036
        %v1038 = vpop.f32.mrb[0].mxu0
        %v1039 = vpop.f32.mrb[0].mxu0
        %v1040 = vadd.f32 0.0, %v1039
        %v1041 = vpop.f32.mrb[0].mxu0
        %1042 = vmatprep.mubr.bf16.mxu0 %v773
        %1043 = vmatmul.mubr.bf16.gmra.mrb[0].mxu0 %v591
        %v1044 = vpop.f32.mrb[0].mxu0
        %v1045 = vadd.f32 0.0, %v1044
        %v1046 = vpop.f32.mrb[0].mxu0
        %v1047 = vpop.f32.mrb[0].mxu0
        %v1048 = vadd.f32 0.0, %v1047
        %v1049 = vpop.f32.mrb[0].mxu0
        %1050 = vmatprep.mubr.bf16.mxu0 %v776
        %1051 = vmatmul.mubr.bf16.gmra.mrb[0].mxu0 %v593
        %v1052 = vpop.f32.mrb[0].mxu0
        %v1053 = vadd.f32 0.0, %v1052
        %v1054 = vpop.f32.mrb[0].mxu0
        %v1055 = vpop.f32.mrb[0].mxu0
        %v1056 = vadd.f32 0.0, %v1055
        %v1057 = vpop.f32.mrb[0].mxu0
        %1058 = vmatprep.mubr.bf16.mxu0 %v779
        %1059 = vmatmul.mubr.bf16.gmra.mrb[0].mxu0 %v595
        %v1060 = vpop.f32.mrb[0].mxu0
        %v1061 = vadd.f32 0.0, %v1060
        %v1062 = vpop.f32.mrb[0].mxu0
        %v1063 = vpop.f32.mrb[0].mxu0
        %v1064 = vadd.f32 0.0, %v1063
        %v1065 = vpop.f32.mrb[0].mxu0
        %1066 = vmatprep.mubr.bf16.mxu0 %v782
        %1067 = vmatmul.mubr.bf16.gmra.mrb[0].mxu0 %v597
        %v1068 = vpop.f32.mrb[0].mxu0
        %v1069 = vadd.f32 0.0, %v1068
        %v1070 = vpop.f32.mrb[0].mxu0
        %v1071 = vpop.f32.mrb[0].mxu0
        %v1072 = vadd.f32 0.0, %v1071
        %v1073 = vpop.f32.mrb[0].mxu0
        %1074 = vmatprep.mubr.bf16.mxu0 %v785
        %1075 = vmatmul.mubr.bf16.gmra.mrb[0].mxu0 %v599
        %v1076 = vpop.f32.mrb[0].mxu0
        %v1077 = vadd.f32 0.0, %v1076
        %v1078 = vpop.f32.mrb[0].mxu0
        %v1079 = vpop.f32.mrb[0].mxu0
        %v1080 = vadd.f32 0.0, %v1079
        %v1081 = vpop.f32.mrb[0].mxu0
        %1082 = vdwg.mxu0
        %v1083 = vld [vmem:[%s256] sm:$0x1]
        %v1085 = vlaneseq
        %v1086 = vshrl.u32 %v1085, 7
        %v1087 = vsub.s32 0, %v1086
        %v1088 = vrot.slane %v1083, %v1087
        %v1090 = vmul.f32 %v829, %v1088
        %v1091 = vmul.f32 %v832, %v1088
        %v1092 = vmul.f32 %v837, %v1088
        %v1093 = vmul.f32 %v840, %v1088
        %v1094 = vmul.f32 %v845, %v1088
        %v1095 = vmul.f32 %v848, %v1088
        %v1096 = vmul.f32 %v853, %v1088
        %v1097 = vmul.f32 %v856, %v1088
        %v1098 = vmul.f32 %v861, %v1088
        %v1099 = vmul.f32 %v864, %v1088
        %v1100 = vmul.f32 %v869, %v1088
        %v1101 = vmul.f32 %v872, %v1088
        %v1102 = vmul.f32 %v877, %v1088
        %v1103 = vmul.f32 %v880, %v1088
        %v1104 = vmul.f32 %v885, %v1088
        %v1105 = vmul.f32 %v888, %v1088
        %v1106 = vmul.f32 %v893, %v1088
        %v1107 = vmul.f32 %v896, %v1088
        %v1108 = vmul.f32 %v901, %v1088
        %v1109 = vmul.f32 %v904, %v1088
        %v1110 = vmul.f32 %v909, %v1088
        %v1111 = vmul.f32 %v912, %v1088
        %v1112 = vmul.f32 %v917, %v1088
        %v1113 = vmul.f32 %v920, %v1088
        %v1114 = vmul.f32 %v925, %v1088
        %v1115 = vmul.f32 %v928, %v1088
        %v1116 = vmul.f32 %v933, %v1088
        %v1117 = vmul.f32 %v936, %v1088
        %v1118 = vmul.f32 %v941, %v1088
        %v1119 = vmul.f32 %v944, %v1088
        %v1120 = vmul.f32 %v949, %v1088
        %v1121 = vmul.f32 %v952, %v1088
        %v1122 = vmul.f32 %v957, %v1088
        %v1123 = vmul.f32 %v960, %v1088
        %v1124 = vmul.f32 %v965, %v1088
        %v1125 = vmul.f32 %v968, %v1088
        %v1126 = vmul.f32 %v973, %v1088
        %v1127 = vmul.f32 %v976, %v1088
        %v1128 = vmul.f32 %v981, %v1088
        %v1129 = vmul.f32 %v984, %v1088
        %v1130 = vmul.f32 %v989, %v1088
        %v1131 = vmul.f32 %v992, %v1088
        %v1132 = vmul.f32 %v997, %v1088
        %v1133 = vmul.f32 %v1000, %v1088
        %v1134 = vmul.f32 %v1005, %v1088
        %v1135 = vmul.f32 %v1008, %v1088
        %v1136 = vmul.f32 %v1013, %v1088
        %v1137 = vmul.f32 %v1016, %v1088
        %v1138 = vmul.f32 %v1021, %v1088
        %v1139 = vmul.f32 %v1024, %v1088
        %v1140 = vmul.f32 %v1029, %v1088
        %v1141 = vmul.f32 %v1032, %v1088
        %v1142 = vmul.f32 %v1037, %v1088
        %v1143 = vmul.f32 %v1040, %v1088
        %v1144 = vmul.f32 %v1045, %v1088
        %v1145 = vmul.f32 %v1048, %v1088
        %v1146 = vmul.f32 %v1053, %v1088
        %v1147 = vmul.f32 %v1056, %v1088
        %v1148 = vmul.f32 %v1061, %v1088
        %v1149 = vmul.f32 %v1064, %v1088
        %v1150 = vmul.f32 %v1069, %v1088
        %v1151 = vmul.f32 %v1072, %v1088
        %v1152 = vmul.f32 %v1077, %v1088
        %v1153 = vmul.f32 %v1080, %v1088
        %v1154 = vld [vmem:[%s259] sm:$0x1]
        %v1156 = vlaneseq
        %v1157 = vshrl.u32 %v1156, 7
        %v1158 = vsub.s32 0, %v1157
        %v1159 = vrot.slane %v1154, %v1158
        %v1161 = vadd.f32 %v1090, %v1159
        %v1162 = vadd.f32 %v1091, %v1159
        %v1163 = vadd.f32 %v1092, %v1159
        %v1164 = vadd.f32 %v1093, %v1159
        %v1165 = vadd.f32 %v1094, %v1159
        %v1166 = vadd.f32 %v1095, %v1159
        %v1167 = vadd.f32 %v1096, %v1159
        %v1168 = vadd.f32 %v1097, %v1159
        %v1169 = vadd.f32 %v1098, %v1159
        %v1170 = vadd.f32 %v1099, %v1159
        %v1171 = vadd.f32 %v1100, %v1159
        %v1172 = vadd.f32 %v1101, %v1159
        %v1173 = vadd.f32 %v1102, %v1159
        %v1174 = vadd.f32 %v1103, %v1159
        %v1175 = vadd.f32 %v1104, %v1159
        %v1176 = vadd.f32 %v1105, %v1159
        %v1177 = vadd.f32 %v1106, %v1159
        %v1178 = vadd.f32 %v1107, %v1159
        %v1179 = vadd.f32 %v1108, %v1159
        %v1180 = vadd.f32 %v1109, %v1159
        %v1181 = vadd.f32 %v1110, %v1159
        %v1182 = vadd.f32 %v1111, %v1159
        %v1183 = vadd.f32 %v1112, %v1159
        %v1184 = vadd.f32 %v1113, %v1159
        %v1185 = vadd.f32 %v1114, %v1159
        %v1186 = vadd.f32 %v1115, %v1159
        %v1187 = vadd.f32 %v1116, %v1159
        %v1188 = vadd.f32 %v1117, %v1159
        %v1189 = vadd.f32 %v1118, %v1159
        %v1190 = vadd.f32 %v1119, %v1159
        %v1191 = vadd.f32 %v1120, %v1159
        %v1192 = vadd.f32 %v1121, %v1159
        %v1193 = vadd.f32 %v1122, %v1159
        %v1194 = vadd.f32 %v1123, %v1159
        %v1195 = vadd.f32 %v1124, %v1159
        %v1196 = vadd.f32 %v1125, %v1159
        %v1197 = vadd.f32 %v1126, %v1159
        %v1198 = vadd.f32 %v1127, %v1159
        %v1199 = vadd.f32 %v1128, %v1159
        %v1200 = vadd.f32 %v1129, %v1159
        %v1201 = vadd.f32 %v1130, %v1159
        %v1202 = vadd.f32 %v1131, %v1159
        %v1203 = vadd.f32 %v1132, %v1159
        %v1204 = vadd.f32 %v1133, %v1159
        %v1205 = vadd.f32 %v1134, %v1159
        %v1206 = vadd.f32 %v1135, %v1159
        %v1207 = vadd.f32 %v1136, %v1159
        %v1208 = vadd.f32 %v1137, %v1159
        %v1209 = vadd.f32 %v1138, %v1159
        %v1210 = vadd.f32 %v1139, %v1159
        %v1211 = vadd.f32 %v1140, %v1159
        %v1212 = vadd.f32 %v1141, %v1159
        %v1213 = vadd.f32 %v1142, %v1159
        %v1214 = vadd.f32 %v1143, %v1159
        %v1215 = vadd.f32 %v1144, %v1159
        %v1216 = vadd.f32 %v1145, %v1159
        %v1217 = vadd.f32 %v1146, %v1159
        %v1218 = vadd.f32 %v1147, %v1159
        %v1219 = vadd.f32 %v1148, %v1159
        %v1220 = vadd.f32 %v1149, %v1159
        %v1221 = vadd.f32 %v1150, %v1159
        %v1222 = vadd.f32 %v1151, %v1159
        %v1223 = vadd.f32 %v1152, %v1159
        %v1224 = vadd.f32 %v1153, %v1159
        %v1225 = vmax.f32 %v1161, 0.0
        %v1226 = vmax.f32 %v1162, 0.0
        %v1227 = vmax.f32 %v1163, 0.0
        %v1228 = vmax.f32 %v1164, 0.0
        %v1229 = vmax.f32 %v1165, 0.0
        %v1230 = vmax.f32 %v1166, 0.0
        %v1231 = vmax.f32 %v1167, 0.0
        %v1232 = vmax.f32 %v1168, 0.0
        %v1233 = vmax.f32 %v1169, 0.0
        %v1234 = vmax.f32 %v1170, 0.0
        %v1235 = vmax.f32 %v1171, 0.0
        %v1236 = vmax.f32 %v1172, 0.0
        %v1237 = vmax.f32 %v1173, 0.0
        %v1238 = vmax.f32 %v1174, 0.0
        %v1239 = vmax.f32 %v1175, 0.0
        %v1240 = vmax.f32 %v1176, 0.0
        %v1241 = vmax.f32 %v1177, 0.0
        %v1242 = vmax.f32 %v1178, 0.0
        %v1243 = vmax.f32 %v1179, 0.0
        %v1244 = vmax.f32 %v1180, 0.0
        %v1245 = vmax.f32 %v1181, 0.0
        %v1246 = vmax.f32 %v1182, 0.0
        %v1247 = vmax.f32 %v1183, 0.0
        %v1248 = vmax.f32 %v1184, 0.0
        %v1249 = vmax.f32 %v1185, 0.0
        %v1250 = vmax.f32 %v1186, 0.0
        %v1251 = vmax.f32 %v1187, 0.0
        %v1252 = vmax.f32 %v1188, 0.0
        %v1253 = vmax.f32 %v1189, 0.0
        %v1254 = vmax.f32 %v1190, 0.0
        %v1255 = vmax.f32 %v1191, 0.0
        %v1256 = vmax.f32 %v1192, 0.0
        %v1257 = vmax.f32 %v1193, 0.0
        %v1258 = vmax.f32 %v1194, 0.0
        %v1259 = vmax.f32 %v1195, 0.0
        %v1260 = vmax.f32 %v1196, 0.0
        %v1261 = vmax.f32 %v1197, 0.0
        %v1262 = vmax.f32 %v1198, 0.0
        %v1263 = vmax.f32 %v1199, 0.0
        %v1264 = vmax.f32 %v1200, 0.0
        %v1265 = vmax.f32 %v1201, 0.0
        %v1266 = vmax.f32 %v1202, 0.0
        %v1267 = vmax.f32 %v1203, 0.0
        %v1268 = vmax.f32 %v1204, 0.0
        %v1269 = vmax.f32 %v1205, 0.0
        %v1270 = vmax.f32 %v1206, 0.0
        %v1271 = vmax.f32 %v1207, 0.0
        %v1272 = vmax.f32 %v1208, 0.0
        %v1273 = vmax.f32 %v1209, 0.0
        %v1274 = vmax.f32 %v1210, 0.0
        %v1275 = vmax.f32 %v1211, 0.0
        %v1276 = vmax.f32 %v1212, 0.0
        %v1277 = vmax.f32 %v1213, 0.0
        %v1278 = vmax.f32 %v1214, 0.0
        %v1279 = vmax.f32 %v1215, 0.0
        %v1280 = vmax.f32 %v1216, 0.0
        %v1281 = vmax.f32 %v1217, 0.0
        %v1282 = vmax.f32 %v1218, 0.0
        %v1283 = vmax.f32 %v1219, 0.0
        %v1284 = vmax.f32 %v1220, 0.0
        %v1285 = vmax.f32 %v1221, 0.0
        %v1286 = vmax.f32 %v1222, 0.0
        %v1287 = vmax.f32 %v1223, 0.0
        %v1288 = vmax.f32 %v1224, 0.0
        %v1289 = vpack.c.bf16 %v1226, %v1225
        %v1290 = vpack.c.bf16 %v1228, %v1227
        %v1291 = vpack.c.bf16 %v1230, %v1229
        %v1292 = vpack.c.bf16 %v1232, %v1231
        %v1293 = vpack.c.bf16 %v1234, %v1233
        %v1294 = vpack.c.bf16 %v1236, %v1235
        %v1295 = vpack.c.bf16 %v1238, %v1237
        %v1296 = vpack.c.bf16 %v1240, %v1239
        %v1297 = vpack.c.bf16 %v1242, %v1241
        %v1298 = vpack.c.bf16 %v1244, %v1243
        %v1299 = vpack.c.bf16 %v1246, %v1245
        %v1300 = vpack.c.bf16 %v1248, %v1247
        %v1301 = vpack.c.bf16 %v1250, %v1249
        %v1302 = vpack.c.bf16 %v1252, %v1251
        %v1303 = vpack.c.bf16 %v1254, %v1253
        %v1304 = vpack.c.bf16 %v1256, %v1255
        %v1305 = vpack.c.bf16 %v1258, %v1257
        %v1306 = vpack.c.bf16 %v1260, %v1259
        %v1307 = vpack.c.bf16 %v1262, %v1261
        %v1308 = vpack.c.bf16 %v1264, %v1263
        %v1309 = vpack.c.bf16 %v1266, %v1265
        %v1310 = vpack.c.bf16 %v1268, %v1267
        %v1311 = vpack.c.bf16 %v1270, %v1269
        %v1312 = vpack.c.bf16 %v1272, %v1271
        %v1313 = vpack.c.bf16 %v1274, %v1273
        %v1314 = vpack.c.bf16 %v1276, %v1275
        %v1315 = vpack.c.bf16 %v1278, %v1277
        %v1316 = vpack.c.bf16 %v1280, %v1279
        %v1317 = vpack.c.bf16 %v1282, %v1281
        %v1318 = vpack.c.bf16 %v1284, %v1283
        %v1319 = vpack.c.bf16 %v1286, %v1285
        %v1320 = vpack.c.bf16 %v1288, %v1287
        %v1353 = vunpack.c.l.b16 %v1289
        %v1354 = vunpack.c.h.b16 %v1289
        %v1355 = vunpack.c.l.b16 %v1290
        %v1356 = vunpack.c.h.b16 %v1290
        %v1357 = vunpack.c.l.b16 %v1291
        %v1358 = vunpack.c.h.b16 %v1291
        %v1359 = vunpack.c.l.b16 %v1292
        %v1360 = vunpack.c.h.b16 %v1292
        %v1361 = vunpack.c.l.b16 %v1293
        %v1362 = vunpack.c.h.b16 %v1293
        %v1363 = vunpack.c.l.b16 %v1294
        %v1364 = vunpack.c.h.b16 %v1294
        %v1365 = vunpack.c.l.b16 %v1295
        %v1366 = vunpack.c.h.b16 %v1295
        %v1367 = vunpack.c.l.b16 %v1296
        %v1368 = vunpack.c.h.b16 %v1296
        %v1369 = vunpack.c.l.b16 %v1297
        %v1370 = vunpack.c.h.b16 %v1297
        %v1371 = vunpack.c.l.b16 %v1298
        %v1372 = vunpack.c.h.b16 %v1298
        %v1373 = vunpack.c.l.b16 %v1299
        %v1374 = vunpack.c.h.b16 %v1299
        %v1375 = vunpack.c.l.b16 %v1300
        %v1376 = vunpack.c.h.b16 %v1300
        %v1377 = vunpack.c.l.b16 %v1301
        %v1378 = vunpack.c.h.b16 %v1301
        %v1379 = vunpack.c.l.b16 %v1302
        %v1380 = vunpack.c.h.b16 %v1302
        %v1381 = vunpack.c.l.b16 %v1303
        %v1382 = vunpack.c.h.b16 %v1303
        %v1383 = vunpack.c.l.b16 %v1304
        %v1384 = vunpack.c.h.b16 %v1304
        %v1385 = vunpack.c.l.b16 %v1305
        %v1386 = vunpack.c.h.b16 %v1305
        %v1387 = vunpack.c.l.b16 %v1306
        %v1388 = vunpack.c.h.b16 %v1306
        %v1389 = vunpack.c.l.b16 %v1307
        %v1390 = vunpack.c.h.b16 %v1307
        %v1391 = vunpack.c.l.b16 %v1308
        %v1392 = vunpack.c.h.b16 %v1308
        %v1393 = vunpack.c.l.b16 %v1309
        %v1394 = vunpack.c.h.b16 %v1309
        %v1395 = vunpack.c.l.b16 %v1310
        %v1396 = vunpack.c.h.b16 %v1310
        %v1397 = vunpack.c.l.b16 %v1311
        %v1398 = vunpack.c.h.b16 %v1311
        %v1399 = vunpack.c.l.b16 %v1312
        %v1400 = vunpack.c.h.b16 %v1312
        %v1401 = vunpack.c.l.b16 %v1313
        %v1402 = vunpack.c.h.b16 %v1313
        %v1403 = vunpack.c.l.b16 %v1314
        %v1404 = vunpack.c.h.b16 %v1314
        %v1405 = vunpack.c.l.b16 %v1315
        %v1406 = vunpack.c.h.b16 %v1315
        %v1407 = vunpack.c.l.b16 %v1316
        %v1408 = vunpack.c.h.b16 %v1316
        %v1409 = vunpack.c.l.b16 %v1317
        %v1410 = vunpack.c.h.b16 %v1317
        %v1411 = vunpack.c.l.b16 %v1318
        %v1412 = vunpack.c.h.b16 %v1318
        %v1413 = vunpack.c.l.b16 %v1319
        %v1414 = vunpack.c.h.b16 %v1319
        %v1415 = vunpack.c.l.b16 %v1320
        %v1416 = vunpack.c.h.b16 %v1320
        %v1417 = vpack.c.b16 %v1353, %v1353
        %v1418 = vpack.c.b16 %v1354, %v1354
        %v1419 = vpack.c.b16 %v1355, %v1355
        %v1420 = vpack.c.b16 %v1356, %v1356
        %v1421 = vpack.c.b16 %v1357, %v1357
        %v1422 = vpack.c.b16 %v1358, %v1358
        %v1423 = vpack.c.b16 %v1359, %v1359
        %v1424 = vpack.c.b16 %v1360, %v1360
        %v1425 = vpack.c.b16 %v1361, %v1361
        %v1426 = vpack.c.b16 %v1362, %v1362
        %v1427 = vpack.c.b16 %v1363, %v1363
        %v1428 = vpack.c.b16 %v1364, %v1364
        %v1429 = vpack.c.b16 %v1365, %v1365
        %v1430 = vpack.c.b16 %v1366, %v1366
        %v1431 = vpack.c.b16 %v1367, %v1367
        %v1432 = vpack.c.b16 %v1368, %v1368
        %v1433 = vpack.c.b16 %v1369, %v1369
        %v1434 = vpack.c.b16 %v1370, %v1370
        %v1435 = vpack.c.b16 %v1371, %v1371
        %v1436 = vpack.c.b16 %v1372, %v1372
        %v1437 = vpack.c.b16 %v1373, %v1373
        %v1438 = vpack.c.b16 %v1374, %v1374
        %v1439 = vpack.c.b16 %v1375, %v1375
        %v1440 = vpack.c.b16 %v1376, %v1376
        %v1441 = vpack.c.b16 %v1377, %v1377
        %v1442 = vpack.c.b16 %v1378, %v1378
        %v1443 = vpack.c.b16 %v1379, %v1379
        %v1444 = vpack.c.b16 %v1380, %v1380
        %v1445 = vpack.c.b16 %v1381, %v1381
        %v1446 = vpack.c.b16 %v1382, %v1382
        %v1447 = vpack.c.b16 %v1383, %v1383
        %v1448 = vpack.c.b16 %v1384, %v1384
        %v1449 = vpack.c.b16 %v1385, %v1385
        %v1450 = vpack.c.b16 %v1386, %v1386
        %v1451 = vpack.c.b16 %v1387, %v1387
        %v1452 = vpack.c.b16 %v1388, %v1388
        %v1453 = vpack.c.b16 %v1389, %v1389
        %v1454 = vpack.c.b16 %v1390, %v1390
        %v1455 = vpack.c.b16 %v1391, %v1391
        %v1456 = vpack.c.b16 %v1392, %v1392
        %v1457 = vpack.c.b16 %v1393, %v1393
        %v1458 = vpack.c.b16 %v1394, %v1394
        %v1459 = vpack.c.b16 %v1395, %v1395
        %v1460 = vpack.c.b16 %v1396, %v1396
        %v1461 = vpack.c.b16 %v1397, %v1397
        %v1462 = vpack.c.b16 %v1398, %v1398
        %v1463 = vpack.c.b16 %v1399, %v1399
        %v1464 = vpack.c.b16 %v1400, %v1400
        %v1465 = vpack.c.b16 %v1401, %v1401
        %v1466 = vpack.c.b16 %v1402, %v1402
        %v1467 = vpack.c.b16 %v1403, %v1403
        %v1468 = vpack.c.b16 %v1404, %v1404
        %v1469 = vpack.c.b16 %v1405, %v1405
        %v1470 = vpack.c.b16 %v1406, %v1406
        %v1471 = vpack.c.b16 %v1407, %v1407
        %v1472 = vpack.c.b16 %v1408, %v1408
        %v1473 = vpack.c.b16 %v1409, %v1409
        %v1474 = vpack.c.b16 %v1410, %v1410
        %v1475 = vpack.c.b16 %v1411, %v1411
        %v1476 = vpack.c.b16 %v1412, %v1412
        %v1477 = vpack.c.b16 %v1413, %v1413
        %v1478 = vpack.c.b16 %v1414, %v1414
        %v1479 = vpack.c.b16 %v1415, %v1415
        %v1480 = vpack.c.b16 %v1416, %v1416
        %1545 = vst [vmem:[%s242] sm:$0xf] %v1417
        %1546 = vst [vmem:[%s242 + $0x4] sm:$0xf] %v1418
        %1547 = vst [vmem:[%s242 + $0x8] sm:$0xf] %v1419
        %1548 = vst [vmem:[%s242 + $0xc] sm:$0xf] %v1420
        %1549 = vst [vmem:[%s242 + $0x10] sm:$0xf] %v1421
        %1550 = vst [vmem:[%s242 + $0x14] sm:$0xf] %v1422
        %1551 = vst [vmem:[%s242 + $0x18] sm:$0xf] %v1423
        %1552 = vst [vmem:[%s242 + $0x1c] sm:$0xf] %v1424
        %1553 = vst [vmem:[%s242 + $0x20] sm:$0xf] %v1425
        %1554 = vst [vmem:[%s242 + $0x24] sm:$0xf] %v1426
        %1555 = vst [vmem:[%s242 + $0x28] sm:$0xf] %v1427
        %1556 = vst [vmem:[%s242 + $0x2c] sm:$0xf] %v1428
        %1557 = vst [vmem:[%s242 + $0x30] sm:$0xf] %v1429
        %1558 = vst [vmem:[%s242 + $0x34] sm:$0xf] %v1430
        %1559 = vst [vmem:[%s242 + $0x38] sm:$0xf] %v1431
        %1560 = vst [vmem:[%s242 + $0x3c] sm:$0xf] %v1432
        %1561 = vst [vmem:[%s242 + $0x40] sm:$0xf] %v1433
        %1562 = vst [vmem:[%s242 + $0x44] sm:$0xf] %v1434
        %1563 = vst [vmem:[%s242 + $0x48] sm:$0xf] %v1435
        %1564 = vst [vmem:[%s242 + $0x4c] sm:$0xf] %v1436
        %1565 = vst [vmem:[%s242 + $0x50] sm:$0xf] %v1437
        %1566 = vst [vmem:[%s242 + $0x54] sm:$0xf] %v1438
        %1567 = vst [vmem:[%s242 + $0x58] sm:$0xf] %v1439
        %1568 = vst [vmem:[%s242 + $0x5c] sm:$0xf] %v1440
        %1569 = vst [vmem:[%s242 + $0x60] sm:$0xf] %v1441
        %1570 = vst [vmem:[%s242 + $0x64] sm:$0xf] %v1442
        %1571 = vst [vmem:[%s242 + $0x68] sm:$0xf] %v1443
        %1572 = vst [vmem:[%s242 + $0x6c] sm:$0xf] %v1444
        %1573 = vst [vmem:[%s242 + $0x70] sm:$0xf] %v1445
        %1574 = vst [vmem:[%s242 + $0x74] sm:$0xf] %v1446
        %1575 = vst [vmem:[%s242 + $0x78] sm:$0xf] %v1447
        %1576 = vst [vmem:[%s242 + $0x7c] sm:$0xf] %v1448
        %1577 = vst [vmem:[%s242 + $0x80] sm:$0xf] %v1449
        %1578 = vst [vmem:[%s242 + $0x84] sm:$0xf] %v1450
        %1579 = vst [vmem:[%s242 + $0x88] sm:$0xf] %v1451
        %1580 = vst [vmem:[%s242 + $0x8c] sm:$0xf] %v1452
        %1581 = vst [vmem:[%s242 + $0x90] sm:$0xf] %v1453
        %1582 = vst [vmem:[%s242 + $0x94] sm:$0xf] %v1454
        %1583 = vst [vmem:[%s242 + $0x98] sm:$0xf] %v1455
        %1584 = vst [vmem:[%s242 + $0x9c] sm:$0xf] %v1456
        %1585 = vst [vmem:[%s242 + $0xa0] sm:$0xf] %v1457
        %1586 = vst [vmem:[%s242 + $0xa4] sm:$0xf] %v1458
        %1587 = vst [vmem:[%s242 + $0xa8] sm:$0xf] %v1459
        %1588 = vst [vmem:[%s242 + $0xac] sm:$0xf] %v1460
        %1589 = vst [vmem:[%s242 + $0xb0] sm:$0xf] %v1461
        %1590 = vst [vmem:[%s242 + $0xb4] sm:$0xf] %v1462
        %1591 = vst [vmem:[%s242 + $0xb8] sm:$0xf] %v1463
        %1592 = vst [vmem:[%s242 + $0xbc] sm:$0xf] %v1464
        %1593 = vst [vmem:[%s242 + $0xc0] sm:$0xf] %v1465
        %1594 = vst [vmem:[%s242 + $0xc4] sm:$0xf] %v1466
        %1595 = vst [vmem:[%s242 + $0xc8] sm:$0xf] %v1467
        %1596 = vst [vmem:[%s242 + $0xcc] sm:$0xf] %v1468
        %1597 = vst [vmem:[%s242 + $0xd0] sm:$0xf] %v1469
        %1598 = vst [vmem:[%s242 + $0xd4] sm:$0xf] %v1470
        %1599 = vst [vmem:[%s242 + $0xd8] sm:$0xf] %v1471
        %1600 = vst [vmem:[%s242 + $0xdc] sm:$0xf] %v1472
        %1601 = vst [vmem:[%s242 + $0xe0] sm:$0xf] %v1473
        %1602 = vst [vmem:[%s242 + $0xe4] sm:$0xf] %v1474
        %1603 = vst [vmem:[%s242 + $0xe8] sm:$0xf] %v1475
        %1604 = vst [vmem:[%s242 + $0xec] sm:$0xf] %v1476
        %1605 = vst [vmem:[%s242 + $0xf0] sm:$0xf] %v1477
        %1606 = vst [vmem:[%s242 + $0xf4] sm:$0xf] %v1478
        %1607 = vst [vmem:[%s242 + $0xf8] sm:$0xf] %v1479
        %1608 = vst [vmem:[%s242 + $0xfc] sm:$0xf] %v1480
        %s1609 = sand.u32 %s144, 1
        %s1610 = scalar_lea.sflag [#allocation3], %s1609
        %s1611 = sand.u32 %s144, 1
        %s1612 = smul.addr %s1611, 256
        %s1613 = scalar_lea.vmem [#allocation2], %s1612
        // Predicated region
        $region37: #{fused_matmul.1} parent=35 // pred_check
          %p1614 = pneg %p154
        $region38: #{fused_matmul.1} parent=35 // pred_check_branch
          %1616 = sbr.rel (%p1614) target = $region40
        $region39: #{fused_matmul.1} parent=35 // pred_region
          %s1617 = smul.u32 64, %s23
          %s1619 = ssub.s32 4096, 4096
          %1620 = vsyncadd %s1610, %s1619
          %s1621 = sadd.s32 %s22, %s1617
          %s1622 = smul.addr %s1621, 64
          %s1623 = scalar_lea.hbm %s4, %s1622
          %s1624 = sshll.u32 %s1613, 4
          %s1625 = int_to_ptr.vmem [resolvable:$true] %s1624
          %1630 = dma.vmem_to_hbm [thread:$0]  %s1625, 4096, %s1623, %s1610, 64, 64, 4
        $region40: #{fused_matmul.1} parent=35 // pred_fallthru
          _
      $region36: #{fused_matmul.1} parent=5 // pred_fallthru
        _
      %p1631 = scmp.le.s32.totalorder 2, %s13
      // Predicated region
      $region41: #{fused_matmul.1} parent=5 // pred_check
        %p1632 = pneg %p1631
      $region42: #{fused_matmul.1} parent=5 // pred_check_branch
        %1634 = sbr.rel (%p1632) target = $region44
      $region43: #{fused_matmul.1} parent=5 // pred_region
        %s1635 = ssub.s32 %s13, 2
        // Predicated region
        $region45: #{fused_matmul.1} parent=43 // pred_check
          %p1636 = pneg %p160
        $region46: #{fused_matmul.1} parent=43 // pred_check_branch
          %1638 = sbr.rel (%p1636) target = $region48
        $region47: #{fused_matmul.1} parent=43 // pred_region
          %s1639 = sand.u32 %s145, 1
          %s1640 = scalar_lea.sflag [#allocation3], %s1639
          %s1641 = sand.u32 %s145, 1
          %s1642 = smul.addr %s1641, 256
          %s1643 = scalar_lea.vmem [#allocation2], %s1642
          %1644 = dma.done %s1640, 4096
        $region48: #{fused_matmul.1} parent=43 // pred_fallthru
          _
      $region44: #{fused_matmul.1} parent=5 // pred_fallthru
        _
    $region6: #{fused_matmul.1} parent=1 // loop_footer
      %s17 = sadd.s32 1, %s13
    $region7: #{fused_matmul.1} parent=1 // loop_footer_branch
      %12 = sbr.rel target = $region3
    $region8: #{fused_matmul.1} parent=1 // loop_exit
      _
    %1645 = vsyncpa [#allocation3], 1
    %s1646 = scalar_lea.sflag [#allocation3], 1
    %1647 = vsyncpa %s1646, 1

</llo_original>
